<compile_context>
chip_gen: v6e
topology: v6e:2x2x1
jax: 0.10.0
libtpu: 0.0.40
codegen_flags: <defaults>
</compile_context>

<pallas_src>
import jax
import jax.numpy as jnp
from jax.experimental import pallas as pl
from jax.experimental.pallas import tpu as pltpu

ACTION_DIM = 2
ENVIRONMENT_DIM = 20
ROBOT_DIM = 4
STATE_DIM = ENVIRONMENT_DIM + ROBOT_DIM  # 24
H1 = 800
H2 = 600
OUT_PAD = 128          # lane-dense padded output width (>= ACTION_DIM)
TB_MAX = 512           # max batch tile (multiple of 8); safe on v5e/v6e/v7x


def _round_up(x, m):
    return ((x + m - 1) // m) * m


def _choose_tile(batch, tb_max):
    """Pick the batch tile: tiny batches get a single small tile; larger
    batches get >= 2 tiles (so v7x's second TensorCore has work), capped at
    tb_max to amortize MXU weight pushes / per-step overhead."""
    b8 = _round_up(max(int(batch), 1), 8)
    if b8 <= 16:
        return b8
    half = _round_up(-(-b8 // 2), 8)   # ceil(b8/2) rounded to 8
    return min(tb_max, half)


def actor_kernel(s_ref, w1_ref, b1_ref, w2_ref, b2_ref, w3_ref, b3_ref, o_ref):
    # layer 1: bf16 x bf16 -> f32 accum, f32 bias+ReLU, bf16 hand-off
    s = s_ref[...].astype(jnp.bfloat16)
    h1 = jnp.dot(s, w1_ref[...], preferred_element_type=jnp.float32)
    h1 = jnp.maximum(h1 + b1_ref[...], 0.0).astype(jnp.bfloat16)
    # layer 2
    h2 = jnp.dot(h1, w2_ref[...], preferred_element_type=jnp.float32)
    h2 = jnp.maximum(h2 + b2_ref[...], 0.0).astype(jnp.bfloat16)
    # layer 3 into the 128-lane padded slab; tanh is applied in the wrapper
    # on the sliced real lanes only.
    h3 = jnp.dot(h2, w3_ref[...], preferred_element_type=jnp.float32)
    o_ref[...] = h3 + b3_ref[...]


def actor_forward(s, params, *, tb_max=TB_MAX):
    """s: [B, STATE_DIM] f32.  params: dict of w1,b1,w2,b2,w3,b3 (weights bf16,
    [in, out] layout; w3/b3 zero-padded to OUT_PAD columns).  Returns
    tanh(layer_3(relu(layer_2(relu(layer_1(s)))))) of shape [B, ACTION_DIM]."""
    B = s.shape[0]
    tb = _choose_tile(B, tb_max)
    n_tiles = pl.cdiv(B, tb)
    B_pad = n_tiles * tb
    if B_pad != B:
        s = jnp.pad(s, ((0, B_pad - B), (0, 0)))

    w1, b1 = params["w1"], params["b1"]
    w2, b2 = params["w2"], params["b2"]
    w3, b3 = params["w3"], params["b3"]

    def const_spec(arr):
        # Whole array, fetched once, VMEM-resident across the batch grid.
        # Single-buffered: the block index never changes, so a second
        # pipeline buffer would be dead VMEM.
        nd = arr.ndim
        return pl.BlockSpec(arr.shape, lambda i, _nd=nd: (0,) * _nd,
                            pipeline_mode=pl.Buffered(1))

    weight_bytes = sum(int(p.size) * p.dtype.itemsize
                       for p in (w1, b1, w2, b2, w3, b3))
    io_bytes = B_pad * (STATE_DIM * 4 + OUT_PAD * 4)
    flops = 2 * B_pad * (STATE_DIM * H1 + H1 * H2 + H2 * OUT_PAD)
    cost = pl.CostEstimate(flops=flops, transcendentals=0,
                           bytes_accessed=weight_bytes + io_bytes)

    # Only raise the scoped VMEM limit if an oversized tile is requested
    # (v5e default scoped VMEM is 16 MiB).
    vmem_limit = (28 << 20) if tb > 512 else None

    out_pad = pl.pallas_call(
        actor_kernel,
        out_shape=jax.ShapeDtypeStruct((B_pad, OUT_PAD), jnp.float32),
        grid_spec=pltpu.PrefetchScalarGridSpec(
            num_scalar_prefetch=0,
            grid=(n_tiles,),
            in_specs=[
                pl.BlockSpec((tb, STATE_DIM), lambda i: (i, 0)),
                const_spec(w1), const_spec(b1),
                const_spec(w2), const_spec(b2),
                const_spec(w3), const_spec(b3),
            ],
            out_specs=pl.BlockSpec((tb, OUT_PAD), lambda i: (i, 0)),
        ),
        compiler_params=pltpu.CompilerParams(
            dimension_semantics=("parallel",),
            vmem_limit_bytes=vmem_limit),
        cost_estimate=cost,
    )(s, w1, b1, w2, b2, w3, b3)

    # Slice off batch padding and dead output lanes, then apply tanh on the
    # real 2 lanes only (EUP work not wasted on 126 padded lanes).
    return jnp.tanh(out_pad[:B, :ACTION_DIM])


def init_params(key):
    """Deterministic init mimicking PyTorch nn.Linear default
    (U(-1/sqrt(fan_in), 1/sqrt(fan_in))).  Weights stored [in, out] in bf16;
    biases in f32.  Layer-3 weight/bias zero-padded to OUT_PAD lanes."""
    ks = jax.random.split(key, 6)

    def linear(kw, kb, fan_in, fan_out):
        bound = 1.0 / jnp.sqrt(fan_in)
        w = jax.random.uniform(kw, (fan_in, fan_out), jnp.float32, -bound, bound)
        b = jax.random.uniform(kb, (1, fan_out), jnp.float32, -bound, bound)
        return w, b

    w1, b1 = linear(ks[0], ks[1], STATE_DIM, H1)
    w2, b2 = linear(ks[2], ks[3], H1, H2)
    w3, b3 = linear(ks[4], ks[5], H2, ACTION_DIM)

    w3p = jnp.zeros((H2, OUT_PAD), jnp.float32).at[:, :ACTION_DIM].set(w3)
    b3p = jnp.zeros((1, OUT_PAD), jnp.float32).at[:, :ACTION_DIM].set(b3)

    return {
        "w1": w1.astype(jnp.bfloat16), "b1": b1,
        "w2": w2.astype(jnp.bfloat16), "b2": b2,
        "w3": w3p.astype(jnp.bfloat16), "b3": b3p,
    }


def actor_reference(s, params):
    """Pure-JAX reference with the same mixed precision as the kernel
    (bf16 matmul inputs, f32 accumulation, f32 bias/ReLU epilogue)."""
    w1, w2 = params["w1"], params["w2"]
    w3 = params["w3"][:, :ACTION_DIM]
    b1, b2 = params["b1"], params["b2"]
    b3 = params["b3"][:, :ACTION_DIM]
    h1 = jnp.dot(s.astype(jnp.bfloat16), w1,
                 preferred_element_type=jnp.float32)
    h1 = jnp.maximum(h1 + b1, 0.0).astype(jnp.bfloat16)
    h2 = jnp.dot(h1, w2, preferred_element_type=jnp.float32)
    h2 = jnp.maximum(h2 + b2, 0.0).astype(jnp.bfloat16)
    h3 = jnp.dot(h2, w3, preferred_element_type=jnp.float32)
    return jnp.tanh(h3 + b3)


if __name__ == "__main__":
    key = jax.random.PRNGKey(0)
    k_param, k_state = jax.random.split(key)

    params = init_params(k_param)
    batch = 2
    s = jax.random.normal(k_state, (batch, STATE_DIM), jnp.float32)

    out = actor_forward(s, params)
    out = jax.block_until_ready(out)

    ref = actor_reference(s, params)
    assert out.shape == (batch, ACTION_DIM)
    assert jnp.allclose(out, ref, atol=1e-3, rtol=1e-3), "mismatch vs reference"

    # Exercise a larger batch to cover the multi-tile (>=2 tiles) path.
    s_big = jax.random.normal(k_state, (200, STATE_DIM), jnp.float32)
    out_big = jax.block_until_ready(actor_forward(s_big, params))
    ref_big = actor_reference(s_big, params)
    assert out_big.shape == (200, ACTION_DIM)
    assert jnp.allclose(out_big, ref_big, atol=1e-3, rtol=1e-3), "mismatch (big batch)"

    print("KERNEL_OK")
</pallas_src>

<mosaic_0001>
module attributes {stable_mosaic.version = 11 : i64} {
  func.func @actor_kernel(%arg0: i32, %arg1: memref<8x24xf32, #tpu.memory_space<vmem>>, %arg2: memref<24x800xbf16, #tpu.memory_space<vmem>>, %arg3: memref<1x800xf32, #tpu.memory_space<vmem>>, %arg4: memref<800x600xbf16, #tpu.memory_space<vmem>>, %arg5: memref<1x600xf32, #tpu.memory_space<vmem>>, %arg6: memref<600x128xbf16, #tpu.memory_space<vmem>>, %arg7: memref<1x128xf32, #tpu.memory_space<vmem>>, %arg8: memref<8x128xf32, #tpu.memory_space<vmem>>) attributes {dimension_semantics = [#tpu.dimension_semantics<parallel>], iteration_bounds = array<i64: 1>, scalar_prefetch = 0 : i64, scratch_operands = 0 : i64, tpu.core_type = #tpu.core_type<tc>, window_params = [{transform_indices = @transform_0, window_bounds = array<i64: 8, 24>}, {pipeline_mode = #tpu.pipeline_mode<synchronous>, transform_indices = @transform_1, window_bounds = array<i64: 24, 800>}, {pipeline_mode = #tpu.pipeline_mode<synchronous>, transform_indices = @transform_2, window_bounds = array<i64: 1, 800>}, {pipeline_mode = #tpu.pipeline_mode<synchronous>, transform_indices = @transform_3, window_bounds = array<i64: 800, 600>}, {pipeline_mode = #tpu.pipeline_mode<synchronous>, transform_indices = @transform_4, window_bounds = array<i64: 1, 600>}, {pipeline_mode = #tpu.pipeline_mode<synchronous>, transform_indices = @transform_5, window_bounds = array<i64: 600, 128>}, {pipeline_mode = #tpu.pipeline_mode<synchronous>, transform_indices = @transform_6, window_bounds = array<i64: 1, 128>}, {transform_indices = @transform_7, window_bounds = array<i64: 8, 128>}]} {
    %c0 = arith.constant 0 : index
    %c0_0 = arith.constant 0 : index
    %0 = vector.load %arg1[%c0, %c0_0] : memref<8x24xf32, #tpu.memory_space<vmem>>, vector<8x24xf32>
    %1 = arith.truncf %0 : vector<8x24xf32> to vector<8x24xbf16>
    %c0_1 = arith.constant 0 : index
    %c0_2 = arith.constant 0 : index
    %2 = vector.load %arg2[%c0_1, %c0_2] : memref<24x800xbf16, #tpu.memory_space<vmem>>, vector<24x800xbf16>
    %cst = arith.constant dense<0.000000e+00> : vector<8x800xf32>
    %3 = tpu.matmul %1, %2, %cst {dimension_numbers = #tpu.dot_dimension_numbers<[1], [0], [0], [1], [0, 0, 1, 1], [], []>} : vector<8x24xbf16>, vector<24x800xbf16>, vector<8x800xf32> -> vector<8x800xf32>
    %c0_3 = arith.constant 0 : index
    %c0_4 = arith.constant 0 : index
    %4 = vector.load %arg3[%c0_3, %c0_4] : memref<1x800xf32, #tpu.memory_space<vmem>>, vector<1x800xf32>
    %5 = vector.broadcast %4 : vector<1x800xf32> to vector<8x800xf32>
    %6 = arith.addf %3, %5 : vector<8x800xf32>
    %cst_5 = arith.constant 0.000000e+00 : f32
    %7 = vector.broadcast %cst_5 : f32 to vector<8x800xf32>
    %8 = arith.maximumf %6, %7 : vector<8x800xf32>
    %9 = arith.truncf %8 : vector<8x800xf32> to vector<8x800xbf16>
    %c0_6 = arith.constant 0 : index
    %c0_7 = arith.constant 0 : index
    %10 = vector.load %arg4[%c0_6, %c0_7] : memref<800x600xbf16, #tpu.memory_space<vmem>>, vector<800x600xbf16>
    %cst_8 = arith.constant dense<0.000000e+00> : vector<8x600xf32>
    %11 = tpu.matmul %9, %10, %cst_8 {dimension_numbers = #tpu.dot_dimension_numbers<[1], [0], [0], [1], [0, 0, 1, 1], [], []>} : vector<8x800xbf16>, vector<800x600xbf16>, vector<8x600xf32> -> vector<8x600xf32>
    %c0_9 = arith.constant 0 : index
    %c0_10 = arith.constant 0 : index
    %12 = vector.load %arg5[%c0_9, %c0_10] : memref<1x600xf32, #tpu.memory_space<vmem>>, vector<1x600xf32>
    %13 = vector.broadcast %12 : vector<1x600xf32> to vector<8x600xf32>
    %14 = arith.addf %11, %13 : vector<8x600xf32>
    %cst_11 = arith.constant 0.000000e+00 : f32
    %15 = vector.broadcast %cst_11 : f32 to vector<8x600xf32>
    %16 = arith.maximumf %14, %15 : vector<8x600xf32>
    %17 = arith.truncf %16 : vector<8x600xf32> to vector<8x600xbf16>
    %c0_12 = arith.constant 0 : index
    %c0_13 = arith.constant 0 : index
    %18 = vector.load %arg6[%c0_12, %c0_13] : memref<600x128xbf16, #tpu.memory_space<vmem>>, vector<600x128xbf16>
    %cst_14 = arith.constant dense<0.000000e+00> : vector<8x128xf32>
    %19 = tpu.matmul %17, %18, %cst_14 {dimension_numbers = #tpu.dot_dimension_numbers<[1], [0], [0], [1], [0, 0, 1, 1], [], []>} : vector<8x600xbf16>, vector<600x128xbf16>, vector<8x128xf32> -> vector<8x128xf32>
    %c0_15 = arith.constant 0 : index
    %c0_16 = arith.constant 0 : index
    %20 = vector.load %arg7[%c0_15, %c0_16] : memref<1x128xf32, #tpu.memory_space<vmem>>, vector<1x128xf32>
    %21 = vector.broadcast %20 : vector<1x128xf32> to vector<8x128xf32>
    %22 = arith.addf %19, %21 : vector<8x128xf32>
    %c0_17 = arith.constant 0 : index
    %c0_18 = arith.constant 0 : index
    %23 = vector.load %arg8[%c0_17, %c0_18] : memref<8x128xf32, #tpu.memory_space<vmem>>, vector<8x128xf32>
    tpu.vector_store %arg8[%c0_17, %c0_18], %22 {strides = array<i32>} : memref<8x128xf32, #tpu.memory_space<vmem>>, vector<8x128xf32>,
    return
  }
  func.func @transform_0(%arg0: i32) -> (i32, i32) {
    %c0_i32 = arith.constant 0 : i32
    %c0_i32_0 = arith.constant 0 : i32
    return %arg0, %c0_i32 : i32, i32
  }
  func.func @transform_1(%arg0: i32) -> (i32, i32) {
    %c0_i32 = arith.constant 0 : i32
    %c0_i32_0 = arith.constant 0 : i32
    %c0_i32_1 = arith.constant 0 : i32
    return %c0_i32, %c0_i32_0 : i32, i32
  }
  func.func @transform_2(%arg0: i32) -> (i32, i32) {
    %c0_i32 = arith.constant 0 : i32
    %c0_i32_0 = arith.constant 0 : i32
    %c0_i32_1 = arith.constant 0 : i32
    return %c0_i32, %c0_i32_0 : i32, i32
  }
  func.func @transform_3(%arg0: i32) -> (i32, i32) {
    %c0_i32 = arith.constant 0 : i32
    %c0_i32_0 = arith.constant 0 : i32
    %c0_i32_1 = arith.constant 0 : i32
    return %c0_i32, %c0_i32_0 : i32, i32
  }
  func.func @transform_4(%arg0: i32) -> (i32, i32) {
    %c0_i32 = arith.constant 0 : i32
    %c0_i32_0 = arith.constant 0 : i32
    %c0_i32_1 = arith.constant 0 : i32
    return %c0_i32, %c0_i32_0 : i32, i32
  }
  func.func @transform_5(%arg0: i32) -> (i32, i32) {
    %c0_i32 = arith.constant 0 : i32
    %c0_i32_0 = arith.constant 0 : i32
    %c0_i32_1 = arith.constant 0 : i32
    return %c0_i32, %c0_i32_0 : i32, i32
  }
  func.func @transform_6(%arg0: i32) -> (i32, i32) {
    %c0_i32 = arith.constant 0 : i32
    %c0_i32_0 = arith.constant 0 : i32
    %c0_i32_1 = arith.constant 0 : i32
    return %c0_i32, %c0_i32_0 : i32, i32
  }
  func.func @transform_7(%arg0: i32) -> (i32, i32) {
    %c0_i32 = arith.constant 0 : i32
    %c0_i32_0 = arith.constant 0 : i32
    return %arg0, %c0_i32 : i32, i32
  }
}

</mosaic_0001>

<llo_original>
// kernel: tpu_custom_call.1
$region0: #{tpu_custom_call.1}
  #allocation0 [shape = 'u32[]', space=smem, size = 0x4, offset = 0x4, fixed_abs, tag = 'smem constant byte address 0x4 - core index']
  #allocation1 [shape = 'u32[144,128]{1,0:T(1,128)}', space=vmem, size = 0x12000, scoped, tag = 'internal scratch']
  %s0 = inlined_call_operand.hbm [shape: f32[8,24], index: 0, kind: input, shape index: {}]
  %s1 = inlined_call_operand.hbm [shape: bf16[24,800], index: 1, kind: input, shape index: {}]
  %s2 = inlined_call_operand.hbm [shape: f32[1,800], index: 2, kind: input, shape index: {}]
  %s3 = inlined_call_operand.hbm [shape: bf16[800,600], index: 3, kind: input, shape index: {}]
  %s4 = inlined_call_operand.vmem [shape: f32[1,600], index: 4, kind: input, shape index: {}]
  %s5 = inlined_call_operand.hbm [shape: bf16[600,128], index: 5, kind: input, shape index: {}]
  %s6 = inlined_call_operand.vmem [shape: f32[1,128], index: 6, kind: input, shape index: {}]
  %s7 = inlined_call_operand.hbm [shape: f32[8,128], index: 7, kind: output, shape index: {}]
  %s8 = sld [smem:[#allocation0]]
  $region58: #{tpu_custom_call.1} parent=0
    _
  %s10 = ssub.s32 1, %s8
  %s11 = scalar_select 0, %s10, %s8
  $region1: #{tpu_custom_call.1} parent=0
    #allocation2 [shape = 'u8[4096]{0}', space=vmem, size = 0x1000, scoped, tag = 'input window, operand 0, single buffered']
    #allocation3 [shape = 's32[1]{0}', space=sflag, size = 0x4, scoped, tag = 'scoped memory for tpu_custom_call.1']
    #allocation4 [shape = 's32[1]{0}', space=sflag, size = 0x4, scoped, tag = 'scoped memory for tpu_custom_call.1']
    #allocation5 [shape = 'u8[43008]{0}', space=vmem, size = 0xa800, scoped, tag = 'input window, operand 1, single buffered']
    #allocation6 [shape = 's32[1]{0}', space=sflag, size = 0x4, scoped, tag = 'scoped memory for tpu_custom_call.1']
    #allocation7 [shape = 'u8[3584]{0}', space=vmem, size = 0x1000, scoped, tag = 'input window, operand 2, single buffered']
    #allocation8 [shape = 'u8[1024000]{0}', space=vmem, size = 0xfa000, scoped, tag = 'input window, operand 3, single buffered']
    #allocation9 [shape = 's32[1]{0}', space=sflag, size = 0x4, scoped, tag = 'scoped memory for tpu_custom_call.1']
    #allocation10 [shape = 'u8[153600]{0}', space=vmem, size = 0x25800, scoped, tag = 'input window, operand 5, single buffered']
    #allocation11 [shape = 'u8[4096]{0}', space=vmem, size = 0x1000, scoped, tag = 'output window, operand 0, single buffered']
    %12 = vsyncpa [#allocation3], 0
    %13 = vsyncpa [#allocation6], 0
    %14 = vsyncpa [#allocation9], 0
    %15 = vsyncpa [#allocation4], 0
    // Predicated region
    $region2: #{tpu_custom_call.1} parent=1 // pred_check
      _
    $region3: #{tpu_custom_call.1} parent=1 // pred_check_branch
      %17 = sbr.rel (0) target = $region5
    $region4: #{tpu_custom_call.1} parent=1 // pred_region
      %s19 = ssub.s32 128, 128
      %20 = vsyncadd [#allocation3], %s19
      %s22 = sshll.u32 [#allocation2], 4
      %s23 = int_to_ptr.vmem [resolvable:$true] %s22
      %25 = dma.hbm_to_vmem [thread:$0]  %s0, 128, %s23, [#allocation3]
    $region5: #{tpu_custom_call.1} parent=1 // pred_fallthru
      _
    // Predicated region
    $region6: #{tpu_custom_call.1} parent=1 // pred_check
      _
    $region7: #{tpu_custom_call.1} parent=1 // pred_check_branch
      %27 = sbr.rel (0) target = $region9
    $region8: #{tpu_custom_call.1} parent=1 // pred_region
      %s29 = ssub.s32 1344, 1344
      %30 = vsyncadd [#allocation6], %s29
      %s31 = sshll.u32 [#allocation5], 4
      %s32 = int_to_ptr.vmem [resolvable:$true] %s31
      %37 = dma.hbm_to_vmem [thread:$0]  %s1, 1344, %s32, [#allocation6], 448, 448, 28
    $region9: #{tpu_custom_call.1} parent=1 // pred_fallthru
      _
    // Predicated region
    $region10: #{tpu_custom_call.1} parent=1 // pred_check
      _
    $region11: #{tpu_custom_call.1} parent=1 // pred_check_branch
      %39 = sbr.rel (0) target = $region13
    $region12: #{tpu_custom_call.1} parent=1 // pred_region
      %s41 = ssub.s32 112, 112
      %42 = vsyncadd [#allocation6], %s41
      %s44 = sshll.u32 [#allocation7], 4
      %s45 = int_to_ptr.vmem [resolvable:$true] %s44
      %47 = dma.hbm_to_vmem [thread:$0]  %s2, 112, %s45, [#allocation6]
    $region13: #{tpu_custom_call.1} parent=1 // pred_fallthru
      _
    // Predicated region
    $region14: #{tpu_custom_call.1} parent=1 // pred_check
      _
    $region15: #{tpu_custom_call.1} parent=1 // pred_check_branch
      %49 = sbr.rel (0) target = $region17
    $region16: #{tpu_custom_call.1} parent=1 // pred_region
      %s51 = ssub.s32 32000, 32000
      %52 = vsyncadd [#allocation9], %s51
      %s53 = sshll.u32 [#allocation8], 4
      %s54 = int_to_ptr.vmem [resolvable:$true] %s53
      %59 = dma.hbm_to_vmem [thread:$0]  %s3, 32000, %s54, [#allocation9], 320, 320, 20
    $region17: #{tpu_custom_call.1} parent=1 // pred_fallthru
      _
    // Predicated region
    $region18: #{tpu_custom_call.1} parent=1 // pred_check
      _
    $region19: #{tpu_custom_call.1} parent=1 // pred_check_branch
      %61 = sbr.rel (0) target = $region21
    $region20: #{tpu_custom_call.1} parent=1 // pred_region
      _
    $region21: #{tpu_custom_call.1} parent=1 // pred_fallthru
      _
    // Predicated region
    $region22: #{tpu_custom_call.1} parent=1 // pred_check
      _
    $region23: #{tpu_custom_call.1} parent=1 // pred_check_branch
      %63 = sbr.rel (0) target = $region25
    $region24: #{tpu_custom_call.1} parent=1 // pred_region
      %s65 = ssub.s32 4800, 4800
      %66 = vsyncadd [#allocation9], %s65
      %s67 = sshll.u32 [#allocation10], 4
      %s68 = int_to_ptr.vmem [resolvable:$true] %s67
      %73 = dma.hbm_to_vmem [thread:$0]  %s5, 4800, %s68, [#allocation9], 64, 64, 4
    $region25: #{tpu_custom_call.1} parent=1 // pred_fallthru
      _
    // Predicated region
    $region26: #{tpu_custom_call.1} parent=1 // pred_check
      _
    $region27: #{tpu_custom_call.1} parent=1 // pred_check_branch
      %75 = sbr.rel (0) target = $region29
    $region28: #{tpu_custom_call.1} parent=1 // pred_region
      _
    $region29: #{tpu_custom_call.1} parent=1 // pred_fallthru
      _
    // Predicated region
    $region30: #{tpu_custom_call.1} parent=1 // pred_check
      _
    $region31: #{tpu_custom_call.1} parent=1 // pred_check_branch
      %77 = sbr.rel (0) target = $region33
    $region32: #{tpu_custom_call.1} parent=1 // pred_region
      %78 = dma.done [#allocation3], 128
    $region33: #{tpu_custom_call.1} parent=1 // pred_fallthru
      _
    // Predicated region
    $region34: #{tpu_custom_call.1} parent=1 // pred_check
      _
    $region35: #{tpu_custom_call.1} parent=1 // pred_check_branch
      %80 = sbr.rel (0) target = $region37
    $region36: #{tpu_custom_call.1} parent=1 // pred_region
      %81 = dma.done [#allocation6], 1344
    $region37: #{tpu_custom_call.1} parent=1 // pred_fallthru
      _
    // Predicated region
    $region38: #{tpu_custom_call.1} parent=1 // pred_check
      _
    $region39: #{tpu_custom_call.1} parent=1 // pred_check_branch
      %83 = sbr.rel (0) target = $region41
    $region40: #{tpu_custom_call.1} parent=1 // pred_region
      %84 = dma.done [#allocation6], 112
    $region41: #{tpu_custom_call.1} parent=1 // pred_fallthru
      _
    // Predicated region
    $region42: #{tpu_custom_call.1} parent=1 // pred_check
      _
    $region43: #{tpu_custom_call.1} parent=1 // pred_check_branch
      %86 = sbr.rel (0) target = $region45
    $region44: #{tpu_custom_call.1} parent=1 // pred_region
      %87 = dma.done [#allocation9], 32000
    $region45: #{tpu_custom_call.1} parent=1 // pred_fallthru
      _
    // Predicated region
    $region46: #{tpu_custom_call.1} parent=1 // pred_check
      _
    $region47: #{tpu_custom_call.1} parent=1 // pred_check_branch
      %89 = sbr.rel (0) target = $region49
    $region48: #{tpu_custom_call.1} parent=1 // pred_region
      %90 = dma.done [#allocation9], 4800
    $region49: #{tpu_custom_call.1} parent=1 // pred_fallthru
      _
    %v92 = vld [vmem:[#allocation2] sm:$0xff]
    %v93 = vpack.c.bf16 %v92, %v92
    %v94 = vld [vmem:[#allocation5] sm:$0xff]
    %v95 = vld [vmem:[#allocation5 + $0x8] sm:$0xff]
    %v96 = vld [vmem:[#allocation5 + $0x10] sm:$0xff]
    %v97 = vld [vmem:[#allocation5 + $0x18] sm:$0xf]
    %v98 = vld [vmem:[#allocation5 + $0x1c] sm:$0xff]
    %v99 = vld [vmem:[#allocation5 + $0x24] sm:$0xff]
    %v100 = vld [vmem:[#allocation5 + $0x2c] sm:$0xff]
    %v101 = vld [vmem:[#allocation5 + $0x34] sm:$0xf]
    %v102 = vld [vmem:[#allocation5 + $0x38] sm:$0xff]
    %v103 = vld [vmem:[#allocation5 + $0x40] sm:$0xff]
    %v104 = vld [vmem:[#allocation5 + $0x48] sm:$0xff]
    %v105 = vld [vmem:[#allocation5 + $0x50] sm:$0xf]
    %v106 = vld [vmem:[#allocation7] sm:$0x7f]
    %v108 = vlaneseq
    %v109 = vshrl.u32 %v108, 7
    %v110 = vsub.s32 0, %v109
    %v111 = vrot.slane %v106, %v110
    %v112 = vlaneseq
    %v113 = vshrl.u32 %v112, 7
    %v114 = vsub.s32 1, %v113
    %v115 = vrot.slane %v106, %v114
    %v116 = vlaneseq
    %v117 = vshrl.u32 %v116, 7
    %v118 = vsub.s32 2, %v117
    %v119 = vrot.slane %v106, %v118
    %v120 = vlaneseq
    %v121 = vshrl.u32 %v120, 7
    %v122 = vsub.s32 3, %v121
    %v123 = vrot.slane %v106, %v122
    %v124 = vlaneseq
    %v125 = vshrl.u32 %v124, 7
    %v126 = vsub.s32 4, %v125
    %v127 = vrot.slane %v106, %v126
    %v128 = vlaneseq
    %v129 = vshrl.u32 %v128, 7
    %v130 = vsub.s32 5, %v129
    %v131 = vrot.slane %v106, %v130
    %v132 = vlaneseq
    %v133 = vshrl.u32 %v132, 7
    %v134 = vsub.s32 6, %v133
    %v135 = vrot.slane %v106, %v134
    %v155 = vunpack.c.l.b16 %v94
    %v156 = vunpack.c.h.b16 %v94
    %v157 = vunpack.c.l.b16 %v95
    %v158 = vunpack.c.h.b16 %v95
    %v159 = vunpack.c.l.b16 %v96
    %v160 = vunpack.c.h.b16 %v96
    %v161 = vunpack.c.l.b16 %v97
    %v162 = vunpack.c.l.b16 %v98
    %v163 = vunpack.c.h.b16 %v98
    %v164 = vunpack.c.l.b16 %v99
    %v165 = vunpack.c.h.b16 %v99
    %v166 = vunpack.c.l.b16 %v100
    %v167 = vunpack.c.h.b16 %v100
    %v168 = vunpack.c.l.b16 %v101
    %v169 = vunpack.c.l.b16 %v102
    %v170 = vunpack.c.h.b16 %v102
    %v171 = vunpack.c.l.b16 %v103
    %v172 = vunpack.c.h.b16 %v103
    %v173 = vunpack.c.l.b16 %v104
    %v174 = vunpack.c.h.b16 %v104
    %v175 = vunpack.c.l.b16 %v105
    %v176 = vpack.c.b16 %v162, %v155
    %v177 = vpack.c.b16 %v163, %v156
    %v178 = vpack.c.b16 %v164, %v157
    %v179 = vpack.c.b16 %v165, %v158
    %v180 = vpack.c.b16 %v166, %v159
    %v181 = vpack.c.b16 %v167, %v160
    %v182 = vpack.c.b16 %v168, %v161
    %v183 = vpack.c.b16 %v169, %v169
    %v184 = vpack.c.b16 %v170, %v170
    %v185 = vpack.c.b16 %v171, %v171
    %v186 = vpack.c.b16 %v172, %v172
    %v187 = vpack.c.b16 %v173, %v173
    %v188 = vpack.c.b16 %v174, %v174
    %v189 = vpack.c.b16 %v175, %v175
    %vm197 = vcmask 195584
    %v199 = vsel %vm197, %v93, 0
    %vm201 = vcmask 1043456
    %v203 = vsel %vm201, %v183, 0
    %v206 = vsel %vm201, %v184, 0
    %v209 = vsel %vm201, %v185, 0
    %v212 = vsel %vm201, %v186, 0
    %v215 = vsel %vm201, %v187, 0
    %v218 = vsel %vm201, %v188, 0
    %v221 = vsel %vm201, %v189, 0
    %223 = vmatprep.subr.bf16.mxu0 0
    %224 = vmatpush1.bf16.msra.mxu0 0
    %225 = vmatprep.subr.bf16.mxu0 0
    %226 = vmatpush1.bf16.msra.mxu0 0
    %227 = vmatprep.subr.bf16.mxu0 0
    %228 = vmatpush1.bf16.msra.mxu0 0
    %229 = vmatprep.subr.bf16.mxu0 0
    %230 = vmatpush1.bf16.msra.mxu0 0
    %231 = vmatprep.subr.bf16.mxu0 0
    %232 = vmatpush1.bf16.msra.mxu0 0
    %233 = vmatprep.subr.bf16.mxu0 0
    %234 = vmatpush1.bf16.msra.mxu0 0
    %235 = vmatprep.subr.bf16.mxu0 %v206
    %236 = vmatpush1.bf16.msra.mxu0 %v203
    %237 = vmatprep.subr.bf16.mxu0 %v177
    %238 = vmatpush1.bf16.msra.mxu0 %v176
    %239 = vmatprep.subr.bf16.mxu0 0
    %240 = vmatpush2.bf16.msra.mxu0 0
    %241 = vmatprep.subr.bf16.mxu0 0
    %242 = vmatpush2.bf16.msra.mxu0 0
    %243 = vmatprep.subr.bf16.mxu0 0
    %244 = vmatpush2.bf16.msra.mxu0 0
    %245 = vmatprep.subr.bf16.mxu0 0
    %246 = vmatpush2.bf16.msra.mxu0 0
    %247 = vmatprep.subr.bf16.mxu0 0
    %248 = vmatpush2.bf16.msra.mxu0 0
    %249 = vmatprep.subr.bf16.mxu0 0
    %250 = vmatpush2.bf16.msra.mxu0 0
    %251 = vmatprep.subr.bf16.mxu0 0
    %252 = vmatpush2.bf16.msra.mxu0 0
    %253 = vmatprep.subr.bf16.mxu0 0
    %254 = vmatpush2.bf16.msra.mxu0 0
    %255 = vmatprep.mubr.bf16.mxu0 0
    %256 = vmatmul.mubr.bf16.gmra.mxu0 %v199
    %v257 = vpop.f32.mrf.mxu0
    %v258 = vadd.f32 %v111, %v257
    %v259 = vpop.f32.mrf.mxu0
    %v260 = vadd.f32 %v115, %v259
    %v261 = vpop.f32.mrf.mxu0
    %v262 = vpop.f32.mrf.mxu0
    %263 = vdwg.mxu0
    %264 = vmatprep.subr.bf16.mxu0 0
    %265 = vmatpush1.bf16.msra.mxu0 0
    %266 = vmatprep.subr.bf16.mxu0 0
    %267 = vmatpush1.bf16.msra.mxu0 0
    %268 = vmatprep.subr.bf16.mxu0 0
    %269 = vmatpush1.bf16.msra.mxu0 0
    %270 = vmatprep.subr.bf16.mxu0 0
    %271 = vmatpush1.bf16.msra.mxu0 0
    %272 = vmatprep.subr.bf16.mxu0 0
    %273 = vmatpush1.bf16.msra.mxu0 0
    %274 = vmatprep.subr.bf16.mxu0 0
    %275 = vmatpush1.bf16.msra.mxu0 0
    %276 = vmatprep.subr.bf16.mxu0 %v212
    %277 = vmatpush1.bf16.msra.mxu0 %v209
    %278 = vmatprep.subr.bf16.mxu0 %v179
    %279 = vmatpush1.bf16.msra.mxu0 %v178
    %280 = vmatprep.subr.bf16.mxu0 0
    %281 = vmatpush2.bf16.msra.mxu0 0
    %282 = vmatprep.subr.bf16.mxu0 0
    %283 = vmatpush2.bf16.msra.mxu0 0
    %284 = vmatprep.subr.bf16.mxu0 0
    %285 = vmatpush2.bf16.msra.mxu0 0
    %286 = vmatprep.subr.bf16.mxu0 0
    %287 = vmatpush2.bf16.msra.mxu0 0
    %288 = vmatprep.subr.bf16.mxu0 0
    %289 = vmatpush2.bf16.msra.mxu0 0
    %290 = vmatprep.subr.bf16.mxu0 0
    %291 = vmatpush2.bf16.msra.mxu0 0
    %292 = vmatprep.subr.bf16.mxu0 0
    %293 = vmatpush2.bf16.msra.mxu0 0
    %294 = vmatprep.subr.bf16.mxu0 0
    %295 = vmatpush2.bf16.msra.mxu0 0
    %296 = vmatprep.mubr.bf16.mxu0 0
    %297 = vmatmul.mubr.bf16.gmra.mxu0 %v199
    %v298 = vpop.f32.mrf.mxu0
    %v299 = vadd.f32 %v119, %v298
    %v300 = vpop.f32.mrf.mxu0
    %v301 = vadd.f32 %v123, %v300
    %v302 = vpop.f32.mrf.mxu0
    %v303 = vpop.f32.mrf.mxu0
    %304 = vdwg.mxu0
    %305 = vmatprep.subr.bf16.mxu0 0
    %306 = vmatpush1.bf16.msra.mxu0 0
    %307 = vmatprep.subr.bf16.mxu0 0
    %308 = vmatpush1.bf16.msra.mxu0 0
    %309 = vmatprep.subr.bf16.mxu0 0
    %310 = vmatpush1.bf16.msra.mxu0 0
    %311 = vmatprep.subr.bf16.mxu0 0
    %312 = vmatpush1.bf16.msra.mxu0 0
    %313 = vmatprep.subr.bf16.mxu0 0
    %314 = vmatpush1.bf16.msra.mxu0 0
    %315 = vmatprep.subr.bf16.mxu0 0
    %316 = vmatpush1.bf16.msra.mxu0 0
    %317 = vmatprep.subr.bf16.mxu0 %v218
    %318 = vmatpush1.bf16.msra.mxu0 %v215
    %319 = vmatprep.subr.bf16.mxu0 %v181
    %320 = vmatpush1.bf16.msra.mxu0 %v180
    %321 = vmatprep.subr.bf16.mxu0 0
    %322 = vmatpush2.bf16.msra.mxu0 0
    %323 = vmatprep.subr.bf16.mxu0 0
    %324 = vmatpush2.bf16.msra.mxu0 0
    %325 = vmatprep.subr.bf16.mxu0 0
    %326 = vmatpush2.bf16.msra.mxu0 0
    %327 = vmatprep.subr.bf16.mxu0 0
    %328 = vmatpush2.bf16.msra.mxu0 0
    %329 = vmatprep.subr.bf16.mxu0 0
    %330 = vmatpush2.bf16.msra.mxu0 0
    %331 = vmatprep.subr.bf16.mxu0 0
    %332 = vmatpush2.bf16.msra.mxu0 0
    %333 = vmatprep.subr.bf16.mxu0 0
    %334 = vmatpush2.bf16.msra.mxu0 0
    %335 = vmatprep.subr.bf16.mxu0 0
    %336 = vmatpush2.bf16.msra.mxu0 0
    %337 = vmatprep.mubr.bf16.mxu0 0
    %338 = vmatmul.mubr.bf16.gmra.mxu0 %v199
    %v339 = vpop.f32.mrf.mxu0
    %v340 = vadd.f32 %v127, %v339
    %v341 = vpop.f32.mrf.mxu0
    %v342 = vadd.f32 %v131, %v341
    %v343 = vpop.f32.mrf.mxu0
    %v344 = vpop.f32.mrf.mxu0
    %345 = vdwg.mxu0
    %346 = vmatprep.subr.bf16.mxu0 0
    %347 = vmatpush1.bf16.msra.mxu0 0
    %348 = vmatprep.subr.bf16.mxu0 0
    %349 = vmatpush1.bf16.msra.mxu0 0
    %350 = vmatprep.subr.bf16.mxu0 0
    %351 = vmatpush1.bf16.msra.mxu0 0
    %352 = vmatprep.subr.bf16.mxu0 0
    %353 = vmatpush1.bf16.msra.mxu0 0
    %354 = vmatprep.subr.bf16.mxu0 0
    %355 = vmatpush1.bf16.msra.mxu0 0
    %356 = vmatprep.subr.bf16.mxu0 0
    %357 = vmatpush1.bf16.msra.mxu0 0
    %358 = vmatprep.subr.bf16.mxu0 0
    %359 = vmatpush1.bf16.msra.mxu0 %v221
    %360 = vmatprep.subr.bf16.mxu0 0
    %361 = vmatpush1.bf16.msra.mxu0 %v182
    %362 = vmatprep.subr.bf16.mxu0 0
    %363 = vmatpush2.bf16.msra.mxu0 0
    %364 = vmatprep.subr.bf16.mxu0 0
    %365 = vmatpush2.bf16.msra.mxu0 0
    %366 = vmatprep.subr.bf16.mxu0 0
    %367 = vmatpush2.bf16.msra.mxu0 0
    %368 = vmatprep.subr.bf16.mxu0 0
    %369 = vmatpush2.bf16.msra.mxu0 0
    %370 = vmatprep.subr.bf16.mxu0 0
    %371 = vmatpush2.bf16.msra.mxu0 0
    %372 = vmatprep.subr.bf16.mxu0 0
    %373 = vmatpush2.bf16.msra.mxu0 0
    %374 = vmatprep.subr.bf16.mxu0 0
    %375 = vmatpush2.bf16.msra.mxu0 0
    %376 = vmatprep.subr.bf16.mxu0 0
    %377 = vmatpush2.bf16.msra.mxu0 0
    %378 = vmatprep.mubr.bf16.mxu0 0
    %379 = vmatmul.mubr.bf16.gmra.mxu0 %v199
    %v380 = vpop.f32.mrf.mxu0
    %v381 = vadd.f32 %v135, %v380
    %v382 = vpop.f32.mrf.mxu0
    %v383 = vpop.f32.mrf.mxu0
    %v384 = vpop.f32.mrf.mxu0
    %385 = vdwg.mxu0
    %v386 = vmax.f32 %v258, 0.0
    %v387 = vmax.f32 %v260, 0.0
    %v388 = vmax.f32 %v299, 0.0
    %v389 = vmax.f32 %v301, 0.0
    %v390 = vmax.f32 %v340, 0.0
    %v391 = vmax.f32 %v342, 0.0
    %v392 = vmax.f32 %v381, 0.0
    %v393 = vpack.c.bf16 %v386, %v386
    %v394 = vpack.c.bf16 %v387, %v387
    %v395 = vpack.c.bf16 %v388, %v388
    %v396 = vpack.c.bf16 %v389, %v389
    %v397 = vpack.c.bf16 %v390, %v390
    %v398 = vpack.c.bf16 %v391, %v391
    %v399 = vpack.c.bf16 %v392, %v392
    %v400 = vld [vmem:[#allocation8] sm:$0xff]
    %v401 = vld [vmem:[#allocation8 + $0x8] sm:$0xff]
    %v402 = vld [vmem:[#allocation8 + $0x10] sm:$0xf]
    %v403 = vld [vmem:[#allocation8 + $0x14] sm:$0xff]
    %v404 = vld [vmem:[#allocation8 + $0x1c] sm:$0xff]
    %v405 = vld [vmem:[#allocation8 + $0x24] sm:$0xf]
    %v406 = vld [vmem:[#allocation8 + $0x28] sm:$0xff]
    %v407 = vld [vmem:[#allocation8 + $0x30] sm:$0xff]
    %v408 = vld [vmem:[#allocation8 + $0x38] sm:$0xf]
    %v409 = vld [vmem:[#allocation8 + $0x3c] sm:$0xff]
    %v410 = vld [vmem:[#allocation8 + $0x44] sm:$0xff]
    %v411 = vld [vmem:[#allocation8 + $0x4c] sm:$0xf]
    %v412 = vld [vmem:[#allocation8 + $0x50] sm:$0xff]
    %v413 = vld [vmem:[#allocation8 + $0x58] sm:$0xff]
    %v414 = vld [vmem:[#allocation8 + $0x60] sm:$0xf]
    %v415 = vld [vmem:[#allocation8 + $0x64] sm:$0xff]
    %v416 = vld [vmem:[#allocation8 + $0x6c] sm:$0xff]
    %v417 = vld [vmem:[#allocation8 + $0x74] sm:$0xf]
    %v418 = vld [vmem:[#allocation8 + $0x78] sm:$0xff]
    %v419 = vld [vmem:[#allocation8 + $0x80] sm:$0xff]
    %v420 = vld [vmem:[#allocation8 + $0x88] sm:$0xf]
    %v421 = vld [vmem:[#allocation8 + $0x8c] sm:$0xff]
    %v422 = vld [vmem:[#allocation8 + $0x94] sm:$0xff]
    %v423 = vld [vmem:[#allocation8 + $0x9c] sm:$0xf]
    %v424 = vld [vmem:[#allocation8 + $0xa0] sm:$0xff]
    %v425 = vld [vmem:[#allocation8 + $0xa8] sm:$0xff]
    %v426 = vld [vmem:[#allocation8 + $0xb0] sm:$0xf]
    %v427 = vld [vmem:[#allocation8 + $0xb4] sm:$0xff]
    %v428 = vld [vmem:[#allocation8 + $0xbc] sm:$0xff]
    %v429 = vld [vmem:[#allocation8 + $0xc4] sm:$0xf]
    %v430 = vld [vmem:[#allocation8 + $0xc8] sm:$0xff]
    %v431 = vld [vmem:[#allocation8 + $0xd0] sm:$0xff]
    %v432 = vld [vmem:[#allocation8 + $0xd8] sm:$0xf]
    %v433 = vld [vmem:[#allocation8 + $0xdc] sm:$0xff]
    %v434 = vld [vmem:[#allocation8 + $0xe4] sm:$0xff]
    %v435 = vld [vmem:[#allocation8 + $0xec] sm:$0xf]
    %v436 = vld [vmem:[#allocation8 + $0xf0] sm:$0xff]
    %v437 = vld [vmem:[#allocation8 + $0xf8] sm:$0xff]
    %v438 = vld [vmem:[#allocation8 + $0x100] sm:$0xf]
    %v439 = vld [vmem:[#allocation8 + $0x104] sm:$0xff]
    %v440 = vld [vmem:[#allocation8 + $0x10c] sm:$0xff]
    %v441 = vld [vmem:[#allocation8 + $0x114] sm:$0xf]
    %v442 = vld [vmem:[#allocation8 + $0x118] sm:$0xff]
    %v443 = vld [vmem:[#allocation8 + $0x120] sm:$0xff]
    %v444 = vld [vmem:[#allocation8 + $0x128] sm:$0xf]
    %v445 = vld [vmem:[#allocation8 + $0x12c] sm:$0xff]
    %v446 = vld [vmem:[#allocation8 + $0x134] sm:$0xff]
    %v447 = vld [vmem:[#allocation8 + $0x13c] sm:$0xf]
    %v448 = vld [vmem:[#allocation8 + $0x140] sm:$0xff]
    %v449 = vld [vmem:[#allocation8 + $0x148] sm:$0xff]
    %v450 = vld [vmem:[#allocation8 + $0x150] sm:$0xf]
    %v451 = vld [vmem:[#allocation8 + $0x154] sm:$0xff]
    %v452 = vld [vmem:[#allocation8 + $0x15c] sm:$0xff]
    %v453 = vld [vmem:[#allocation8 + $0x164] sm:$0xf]
    %v454 = vld [vmem:[#allocation8 + $0x168] sm:$0xff]
    %v455 = vld [vmem:[#allocation8 + $0x170] sm:$0xff]
    %v456 = vld [vmem:[#allocation8 + $0x178] sm:$0xf]
    %v457 = vld [vmem:[#allocation8 + $0x17c] sm:$0xff]
    %v458 = vld [vmem:[#allocation8 + $0x184] sm:$0xff]
    %v459 = vld [vmem:[#allocation8 + $0x18c] sm:$0xf]
    %v460 = vld [vmem:[#allocation8 + $0x190] sm:$0xff]
    %v461 = vld [vmem:[#allocation8 + $0x198] sm:$0xff]
    %v462 = vld [vmem:[#allocation8 + $0x1a0] sm:$0xf]
    %v463 = vld [vmem:[#allocation8 + $0x1a4] sm:$0xff]
    %v464 = vld [vmem:[#allocation8 + $0x1ac] sm:$0xff]
    %v465 = vld [vmem:[#allocation8 + $0x1b4] sm:$0xf]
    %v466 = vld [vmem:[#allocation8 + $0x1b8] sm:$0xff]
    %v467 = vld [vmem:[#allocation8 + $0x1c0] sm:$0xff]
    %v468 = vld [vmem:[#allocation8 + $0x1c8] sm:$0xf]
    %v469 = vld [vmem:[#allocation8 + $0x1cc] sm:$0xff]
    %v470 = vld [vmem:[#allocation8 + $0x1d4] sm:$0xff]
    %v471 = vld [vmem:[#allocation8 + $0x1dc] sm:$0xf]
    %v472 = vld [vmem:[#allocation8 + $0x1e0] sm:$0xff]
    %v473 = vld [vmem:[#allocation8 + $0x1e8] sm:$0xff]
    %v474 = vld [vmem:[#allocation8 + $0x1f0] sm:$0xf]
    %v475 = vld [vmem:[#allocation8 + $0x1f4] sm:$0xff]
    %v476 = vld [vmem:[#allocation8 + $0x1fc] sm:$0xff]
    %v477 = vld [vmem:[#allocation8 + $0x204] sm:$0xf]
    %v478 = vld [vmem:[#allocation8 + $0x208] sm:$0xff]
    %v479 = vld [vmem:[#allocation8 + $0x210] sm:$0xff]
    %v480 = vld [vmem:[#allocation8 + $0x218] sm:$0xf]
    %v481 = vld [vmem:[#allocation8 + $0x21c] sm:$0xff]
    %v482 = vld [vmem:[#allocation8 + $0x224] sm:$0xff]
    %v483 = vld [vmem:[#allocation8 + $0x22c] sm:$0xf]
    %v484 = vld [vmem:[#allocation8 + $0x230] sm:$0xff]
    %v485 = vld [vmem:[#allocation8 + $0x238] sm:$0xff]
    %v486 = vld [vmem:[#allocation8 + $0x240] sm:$0xf]
    %v487 = vld [vmem:[#allocation8 + $0x244] sm:$0xff]
    %v488 = vld [vmem:[#allocation8 + $0x24c] sm:$0xff]
    %v489 = vld [vmem:[#allocation8 + $0x254] sm:$0xf]
    %v490 = vld [vmem:[#allocation8 + $0x258] sm:$0xff]
    %v491 = vld [vmem:[#allocation8 + $0x260] sm:$0xff]
    %v492 = vld [vmem:[#allocation8 + $0x268] sm:$0xf]
    %v493 = vld [vmem:[#allocation8 + $0x26c] sm:$0xff]
    %v494 = vld [vmem:[#allocation8 + $0x274] sm:$0xff]
    %v495 = vld [vmem:[#allocation8 + $0x27c] sm:$0xf]
    %v496 = vld [vmem:[#allocation8 + $0x280] sm:$0xff]
    %v497 = vld [vmem:[#allocation8 + $0x288] sm:$0xff]
    %v498 = vld [vmem:[#allocation8 + $0x290] sm:$0xf]
    %v499 = vld [vmem:[#allocation8 + $0x294] sm:$0xff]
    %v500 = vld [vmem:[#allocation8 + $0x29c] sm:$0xff]
    %v501 = vld [vmem:[#allocation8 + $0x2a4] sm:$0xf]
    %v502 = vld [vmem:[#allocation8 + $0x2a8] sm:$0xff]
    %v503 = vld [vmem:[#allocation8 + $0x2b0] sm:$0xff]
    %v504 = vld [vmem:[#allocation8 + $0x2b8] sm:$0xf]
    %v505 = vld [vmem:[#allocation8 + $0x2bc] sm:$0xff]
    %v506 = vld [vmem:[#allocation8 + $0x2c4] sm:$0xff]
    %v507 = vld [vmem:[#allocation8 + $0x2cc] sm:$0xf]
    %v508 = vld [vmem:[#allocation8 + $0x2d0] sm:$0xff]
    %v509 = vld [vmem:[#allocation8 + $0x2d8] sm:$0xff]
    %v510 = vld [vmem:[#allocation8 + $0x2e0] sm:$0xf]
    %v511 = vld [vmem:[#allocation8 + $0x2e4] sm:$0xff]
    %v512 = vld [vmem:[#allocation8 + $0x2ec] sm:$0xff]
    %v513 = vld [vmem:[#allocation8 + $0x2f4] sm:$0xf]
    %v514 = vld [vmem:[#allocation8 + $0x2f8] sm:$0xff]
    %v515 = vld [vmem:[#allocation8 + $0x300] sm:$0xff]
    %v516 = vld [vmem:[#allocation8 + $0x308] sm:$0xf]
    %v517 = vld [vmem:[#allocation8 + $0x30c] sm:$0xff]
    %v518 = vld [vmem:[#allocation8 + $0x314] sm:$0xff]
    %v519 = vld [vmem:[#allocation8 + $0x31c] sm:$0xf]
    %v520 = vld [vmem:[#allocation8 + $0x320] sm:$0xff]
    %v521 = vld [vmem:[#allocation8 + $0x328] sm:$0xff]
    %v522 = vld [vmem:[#allocation8 + $0x330] sm:$0xf]
    %v523 = vld [vmem:[#allocation8 + $0x334] sm:$0xff]
    %v524 = vld [vmem:[#allocation8 + $0x33c] sm:$0xff]
    %v525 = vld [vmem:[#allocation8 + $0x344] sm:$0xf]
    %v526 = vld [vmem:[#allocation8 + $0x348] sm:$0xff]
    %v527 = vld [vmem:[#allocation8 + $0x350] sm:$0xff]
    %v528 = vld [vmem:[#allocation8 + $0x358] sm:$0xf]
    %v529 = vld [vmem:[#allocation8 + $0x35c] sm:$0xff]
    %v530 = vld [vmem:[#allocation8 + $0x364] sm:$0xff]
    %v531 = vld [vmem:[#allocation8 + $0x36c] sm:$0xf]
    %v532 = vld [vmem:[#allocation8 + $0x370] sm:$0xff]
    %v533 = vld [vmem:[#allocation8 + $0x378] sm:$0xff]
    %v534 = vld [vmem:[#allocation8 + $0x380] sm:$0xf]
    %v535 = vld [vmem:[#allocation8 + $0x384] sm:$0xff]
    %v536 = vld [vmem:[#allocation8 + $0x38c] sm:$0xff]
    %v537 = vld [vmem:[#allocation8 + $0x394] sm:$0xf]
    %v538 = vld [vmem:[#allocation8 + $0x398] sm:$0xff]
    %v539 = vld [vmem:[#allocation8 + $0x3a0] sm:$0xff]
    %v540 = vld [vmem:[#allocation8 + $0x3a8] sm:$0xf]
    %v541 = vld [vmem:[#allocation8 + $0x3ac] sm:$0xff]
    %v542 = vld [vmem:[#allocation8 + $0x3b4] sm:$0xff]
    %v543 = vld [vmem:[#allocation8 + $0x3bc] sm:$0xf]
    %v544 = vld [vmem:[#allocation8 + $0x3c0] sm:$0xff]
    %v545 = vld [vmem:[#allocation8 + $0x3c8] sm:$0xff]
    %v546 = vld [vmem:[#allocation8 + $0x3d0] sm:$0xf]
    %v547 = vld [vmem:[#allocation8 + $0x3d4] sm:$0xff]
    %v548 = vld [vmem:[#allocation8 + $0x3dc] sm:$0xff]
    %v549 = vld [vmem:[#allocation8 + $0x3e4] sm:$0xf]
    %v550 = vld [vmem:[#allocation8 + $0x3e8] sm:$0xff]
    %v551 = vld [vmem:[#allocation8 + $0x3f0] sm:$0xff]
    %v552 = vld [vmem:[#allocation8 + $0x3f8] sm:$0xf]
    %v553 = vld [vmem:[#allocation8 + $0x3fc] sm:$0xff]
    %v554 = vld [vmem:[#allocation8 + $0x404] sm:$0xff]
    %v555 = vld [vmem:[#allocation8 + $0x40c] sm:$0xf]
    %v556 = vld [vmem:[#allocation8 + $0x410] sm:$0xff]
    %v557 = vld [vmem:[#allocation8 + $0x418] sm:$0xff]
    %v558 = vld [vmem:[#allocation8 + $0x420] sm:$0xf]
    %v559 = vld [vmem:[#allocation8 + $0x424] sm:$0xff]
    %v560 = vld [vmem:[#allocation8 + $0x42c] sm:$0xff]
    %v561 = vld [vmem:[#allocation8 + $0x434] sm:$0xf]
    %v562 = vld [vmem:[#allocation8 + $0x438] sm:$0xff]
    %v563 = vld [vmem:[#allocation8 + $0x440] sm:$0xff]
    %v564 = vld [vmem:[#allocation8 + $0x448] sm:$0xf]
    %v565 = vld [vmem:[#allocation8 + $0x44c] sm:$0xff]
    %v566 = vld [vmem:[#allocation8 + $0x454] sm:$0xff]
    %v567 = vld [vmem:[#allocation8 + $0x45c] sm:$0xf]
    %v568 = vld [vmem:[#allocation8 + $0x460] sm:$0xff]
    %v569 = vld [vmem:[#allocation8 + $0x468] sm:$0xff]
    %v570 = vld [vmem:[#allocation8 + $0x470] sm:$0xf]
    %v571 = vld [vmem:[#allocation8 + $0x474] sm:$0xff]
    %v572 = vld [vmem:[#allocation8 + $0x47c] sm:$0xff]
    %v573 = vld [vmem:[#allocation8 + $0x484] sm:$0xf]
    %v574 = vld [vmem:[#allocation8 + $0x488] sm:$0xff]
    %v575 = vld [vmem:[#allocation8 + $0x490] sm:$0xff]
    %v576 = vld [vmem:[#allocation8 + $0x498] sm:$0xf]
    %v577 = vld [vmem:[#allocation8 + $0x49c] sm:$0xff]
    %v578 = vld [vmem:[#allocation8 + $0x4a4] sm:$0xff]
    %v579 = vld [vmem:[#allocation8 + $0x4ac] sm:$0xf]
    %v580 = vld [vmem:[#allocation8 + $0x4b0] sm:$0xff]
    %v581 = vld [vmem:[#allocation8 + $0x4b8] sm:$0xff]
    %v582 = vld [vmem:[#allocation8 + $0x4c0] sm:$0xf]
    %v583 = vld [vmem:[#allocation8 + $0x4c4] sm:$0xff]
    %v584 = vld [vmem:[#allocation8 + $0x4cc] sm:$0xff]
    %v585 = vld [vmem:[#allocation8 + $0x4d4] sm:$0xf]
    %v586 = vld [vmem:[#allocation8 + $0x4d8] sm:$0xff]
    %v587 = vld [vmem:[#allocation8 + $0x4e0] sm:$0xff]
    %v588 = vld [vmem:[#allocation8 + $0x4e8] sm:$0xf]
    %v589 = vld [vmem:[#allocation8 + $0x4ec] sm:$0xff]
    %v590 = vld [vmem:[#allocation8 + $0x4f4] sm:$0xff]
    %v591 = vld [vmem:[#allocation8 + $0x4fc] sm:$0xf]
    %v592 = vld [vmem:[#allocation8 + $0x500] sm:$0xff]
    %v593 = vld [vmem:[#allocation8 + $0x508] sm:$0xff]
    %v594 = vld [vmem:[#allocation8 + $0x510] sm:$0xf]
    %v595 = vld [vmem:[#allocation8 + $0x514] sm:$0xff]
    %v596 = vld [vmem:[#allocation8 + $0x51c] sm:$0xff]
    %v597 = vld [vmem:[#allocation8 + $0x524] sm:$0xf]
    %v598 = vld [vmem:[#allocation8 + $0x528] sm:$0xff]
    %v599 = vld [vmem:[#allocation8 + $0x530] sm:$0xff]
    %v600 = vld [vmem:[#allocation8 + $0x538] sm:$0xf]
    %v601 = vld [vmem:[#allocation8 + $0x53c] sm:$0xff]
    %v602 = vld [vmem:[#allocation8 + $0x544] sm:$0xff]
    %v603 = vld [vmem:[#allocation8 + $0x54c] sm:$0xf]
    %v604 = vld [vmem:[#allocation8 + $0x550] sm:$0xff]
    %v605 = vld [vmem:[#allocation8 + $0x558] sm:$0xff]
    %v606 = vld [vmem:[#allocation8 + $0x560] sm:$0xf]
    %v607 = vld [vmem:[#allocation8 + $0x564] sm:$0xff]
    %v608 = vld [vmem:[#allocation8 + $0x56c] sm:$0xff]
    %v609 = vld [vmem:[#allocation8 + $0x574] sm:$0xf]
    %v610 = vld [vmem:[#allocation8 + $0x578] sm:$0xff]
    %v611 = vld [vmem:[#allocation8 + $0x580] sm:$0xff]
    %v612 = vld [vmem:[#allocation8 + $0x588] sm:$0xf]
    %v613 = vld [vmem:[#allocation8 + $0x58c] sm:$0xff]
    %v614 = vld [vmem:[#allocation8 + $0x594] sm:$0xff]
    %v615 = vld [vmem:[#allocation8 + $0x59c] sm:$0xf]
    %v616 = vld [vmem:[#allocation8 + $0x5a0] sm:$0xff]
    %v617 = vld [vmem:[#allocation8 + $0x5a8] sm:$0xff]
    %v618 = vld [vmem:[#allocation8 + $0x5b0] sm:$0xf]
    %v619 = vld [vmem:[#allocation8 + $0x5b4] sm:$0xff]
    %v620 = vld [vmem:[#allocation8 + $0x5bc] sm:$0xff]
    %v621 = vld [vmem:[#allocation8 + $0x5c4] sm:$0xf]
    %v622 = vld [vmem:[#allocation8 + $0x5c8] sm:$0xff]
    %v623 = vld [vmem:[#allocation8 + $0x5d0] sm:$0xff]
    %v624 = vld [vmem:[#allocation8 + $0x5d8] sm:$0xf]
    %v625 = vld [vmem:[#allocation8 + $0x5dc] sm:$0xff]
    %v626 = vld [vmem:[#allocation8 + $0x5e4] sm:$0xff]
    %v627 = vld [vmem:[#allocation8 + $0x5ec] sm:$0xf]
    %v628 = vld [vmem:[#allocation8 + $0x5f0] sm:$0xff]
    %v629 = vld [vmem:[#allocation8 + $0x5f8] sm:$0xff]
    %v630 = vld [vmem:[#allocation8 + $0x600] sm:$0xf]
    %v631 = vld [vmem:[#allocation8 + $0x604] sm:$0xff]
    %v632 = vld [vmem:[#allocation8 + $0x60c] sm:$0xff]
    %v633 = vld [vmem:[#allocation8 + $0x614] sm:$0xf]
    %v634 = vld [vmem:[#allocation8 + $0x618] sm:$0xff]
    %v635 = vld [vmem:[#allocation8 + $0x620] sm:$0xff]
    %v636 = vld [vmem:[#allocation8 + $0x628] sm:$0xf]
    %v637 = vld [vmem:[#allocation8 + $0x62c] sm:$0xff]
    %v638 = vld [vmem:[#allocation8 + $0x634] sm:$0xff]
    %v639 = vld [vmem:[#allocation8 + $0x63c] sm:$0xf]
    %v640 = vld [vmem:[#allocation8 + $0x640] sm:$0xff]
    %v641 = vld [vmem:[#allocation8 + $0x648] sm:$0xff]
    %v642 = vld [vmem:[#allocation8 + $0x650] sm:$0xf]
    %v643 = vld [vmem:[#allocation8 + $0x654] sm:$0xff]
    %v644 = vld [vmem:[#allocation8 + $0x65c] sm:$0xff]
    %v645 = vld [vmem:[#allocation8 + $0x664] sm:$0xf]
    %v646 = vld [vmem:[#allocation8 + $0x668] sm:$0xff]
    %v647 = vld [vmem:[#allocation8 + $0x670] sm:$0xff]
    %v648 = vld [vmem:[#allocation8 + $0x678] sm:$0xf]
    %v649 = vld [vmem:[#allocation8 + $0x67c] sm:$0xff]
    %v650 = vld [vmem:[#allocation8 + $0x684] sm:$0xff]
    %v651 = vld [vmem:[#allocation8 + $0x68c] sm:$0xf]
    %v652 = vld [vmem:[#allocation8 + $0x690] sm:$0xff]
    %v653 = vld [vmem:[#allocation8 + $0x698] sm:$0xff]
    %v654 = vld [vmem:[#allocation8 + $0x6a0] sm:$0xf]
    %v655 = vld [vmem:[#allocation8 + $0x6a4] sm:$0xff]
    %v656 = vld [vmem:[#allocation8 + $0x6ac] sm:$0xff]
    %v657 = vld [vmem:[#allocation8 + $0x6b4] sm:$0xf]
    %v658 = vld [vmem:[#allocation8 + $0x6b8] sm:$0xff]
    %v659 = vld [vmem:[#allocation8 + $0x6c0] sm:$0xff]
    %v660 = vld [vmem:[#allocation8 + $0x6c8] sm:$0xf]
    %v661 = vld [vmem:[#allocation8 + $0x6cc] sm:$0xff]
    %v662 = vld [vmem:[#allocation8 + $0x6d4] sm:$0xff]
    %v663 = vld [vmem:[#allocation8 + $0x6dc] sm:$0xf]
    %v664 = vld [vmem:[#allocation8 + $0x6e0] sm:$0xff]
    %v665 = vld [vmem:[#allocation8 + $0x6e8] sm:$0xff]
    %v666 = vld [vmem:[#allocation8 + $0x6f0] sm:$0xf]
    %v667 = vld [vmem:[#allocation8 + $0x6f4] sm:$0xff]
    %v668 = vld [vmem:[#allocation8 + $0x6fc] sm:$0xff]
    %v669 = vld [vmem:[#allocation8 + $0x704] sm:$0xf]
    %v670 = vld [vmem:[#allocation8 + $0x708] sm:$0xff]
    %v671 = vld [vmem:[#allocation8 + $0x710] sm:$0xff]
    %v672 = vld [vmem:[#allocation8 + $0x718] sm:$0xf]
    %v673 = vld [vmem:[#allocation8 + $0x71c] sm:$0xff]
    %v674 = vld [vmem:[#allocation8 + $0x724] sm:$0xff]
    %v675 = vld [vmem:[#allocation8 + $0x72c] sm:$0xf]
    %v676 = vld [vmem:[#allocation8 + $0x730] sm:$0xff]
    %v677 = vld [vmem:[#allocation8 + $0x738] sm:$0xff]
    %v678 = vld [vmem:[#allocation8 + $0x740] sm:$0xf]
    %v679 = vld [vmem:[#allocation8 + $0x744] sm:$0xff]
    %v680 = vld [vmem:[#allocation8 + $0x74c] sm:$0xff]
    %v681 = vld [vmem:[#allocation8 + $0x754] sm:$0xf]
    %v682 = vld [vmem:[#allocation8 + $0x758] sm:$0xff]
    %v683 = vld [vmem:[#allocation8 + $0x760] sm:$0xff]
    %v684 = vld [vmem:[#allocation8 + $0x768] sm:$0xf]
    %v685 = vld [vmem:[#allocation8 + $0x76c] sm:$0xff]
    %v686 = vld [vmem:[#allocation8 + $0x774] sm:$0xff]
    %v687 = vld [vmem:[#allocation8 + $0x77c] sm:$0xf]
    %v688 = vld [vmem:[#allocation8 + $0x780] sm:$0xff]
    %v689 = vld [vmem:[#allocation8 + $0x788] sm:$0xff]
    %v690 = vld [vmem:[#allocation8 + $0x790] sm:$0xf]
    %v691 = vld [vmem:[#allocation8 + $0x794] sm:$0xff]
    %v692 = vld [vmem:[#allocation8 + $0x79c] sm:$0xff]
    %v693 = vld [vmem:[#allocation8 + $0x7a4] sm:$0xf]
    %v694 = vld [vmem:[#allocation8 + $0x7a8] sm:$0xff]
    %v695 = vld [vmem:[#allocation8 + $0x7b0] sm:$0xff]
    %v696 = vld [vmem:[#allocation8 + $0x7b8] sm:$0xf]
    %v697 = vld [vmem:[#allocation8 + $0x7bc] sm:$0xff]
    %v698 = vld [vmem:[#allocation8 + $0x7c4] sm:$0xff]
    %v699 = vld [vmem:[#allocation8 + $0x7cc] sm:$0xf]
    %v700 = vld [vmem:[%s4] sm:$0x1f]
    %v702 = vlaneseq
    %v703 = vshrl.u32 %v702, 7
    %v704 = vsub.s32 0, %v703
    %v705 = vrot.slane %v700, %v704
    %v706 = vlaneseq
    %v707 = vshrl.u32 %v706, 7
    %v708 = vsub.s32 1, %v707
    %v709 = vrot.slane %v700, %v708
    %v710 = vlaneseq
    %v711 = vshrl.u32 %v710, 7
    %v712 = vsub.s32 2, %v711
    %v713 = vrot.slane %v700, %v712
    %v714 = vlaneseq
    %v715 = vshrl.u32 %v714, 7
    %v716 = vsub.s32 3, %v715
    %v717 = vrot.slane %v700, %v716
    %v718 = vlaneseq
    %v719 = vshrl.u32 %v718, 7
    %v720 = vsub.s32 4, %v719
    %v721 = vrot.slane %v700, %v720
    %v1027 = vunpack.c.l.b16 %v400
    %v1028 = vunpack.c.h.b16 %v400
    %v1029 = vunpack.c.l.b16 %v401
    %v1030 = vunpack.c.h.b16 %v401
    %v1031 = vunpack.c.l.b16 %v402
    %v1032 = vunpack.c.l.b16 %v403
    %v1033 = vunpack.c.h.b16 %v403
    %v1034 = vunpack.c.l.b16 %v404
    %v1035 = vunpack.c.h.b16 %v404
    %v1036 = vunpack.c.l.b16 %v405
    %v1037 = vunpack.c.l.b16 %v406
    %v1038 = vunpack.c.h.b16 %v406
    %v1039 = vunpack.c.l.b16 %v407
    %v1040 = vunpack.c.h.b16 %v407
    %v1041 = vunpack.c.l.b16 %v408
    %v1042 = vunpack.c.l.b16 %v409
    %v1043 = vunpack.c.h.b16 %v409
    %v1044 = vunpack.c.l.b16 %v410
    %v1045 = vunpack.c.h.b16 %v410
    %v1046 = vunpack.c.l.b16 %v411
    %v1047 = vunpack.c.l.b16 %v412
    %v1048 = vunpack.c.h.b16 %v412
    %v1049 = vunpack.c.l.b16 %v413
    %v1050 = vunpack.c.h.b16 %v413
    %v1051 = vunpack.c.l.b16 %v414
    %v1052 = vunpack.c.l.b16 %v415
    %v1053 = vunpack.c.h.b16 %v415
    %v1054 = vunpack.c.l.b16 %v416
    %v1055 = vunpack.c.h.b16 %v416
    %v1056 = vunpack.c.l.b16 %v417
    %v1057 = vunpack.c.l.b16 %v418
    %v1058 = vunpack.c.h.b16 %v418
    %v1059 = vunpack.c.l.b16 %v419
    %v1060 = vunpack.c.h.b16 %v419
    %v1061 = vunpack.c.l.b16 %v420
    %v1062 = vunpack.c.l.b16 %v421
    %v1063 = vunpack.c.h.b16 %v421
    %v1064 = vunpack.c.l.b16 %v422
    %v1065 = vunpack.c.h.b16 %v422
    %v1066 = vunpack.c.l.b16 %v423
    %v1067 = vunpack.c.l.b16 %v424
    %v1068 = vunpack.c.h.b16 %v424
    %v1069 = vunpack.c.l.b16 %v425
    %v1070 = vunpack.c.h.b16 %v425
    %v1071 = vunpack.c.l.b16 %v426
    %v1072 = vunpack.c.l.b16 %v427
    %v1073 = vunpack.c.h.b16 %v427
    %v1074 = vunpack.c.l.b16 %v428
    %v1075 = vunpack.c.h.b16 %v428
    %v1076 = vunpack.c.l.b16 %v429
    %v1077 = vunpack.c.l.b16 %v430
    %v1078 = vunpack.c.h.b16 %v430
    %v1079 = vunpack.c.l.b16 %v431
    %v1080 = vunpack.c.h.b16 %v431
    %v1081 = vunpack.c.l.b16 %v432
    %v1082 = vunpack.c.l.b16 %v433
    %v1083 = vunpack.c.h.b16 %v433
    %v1084 = vunpack.c.l.b16 %v434
    %v1085 = vunpack.c.h.b16 %v434
    %v1086 = vunpack.c.l.b16 %v435
    %v1087 = vunpack.c.l.b16 %v436
    %v1088 = vunpack.c.h.b16 %v436
    %v1089 = vunpack.c.l.b16 %v437
    %v1090 = vunpack.c.h.b16 %v437
    %v1091 = vunpack.c.l.b16 %v438
    %v1092 = vunpack.c.l.b16 %v439
    %v1093 = vunpack.c.h.b16 %v439
    %v1094 = vunpack.c.l.b16 %v440
    %v1095 = vunpack.c.h.b16 %v440
    %v1096 = vunpack.c.l.b16 %v441
    %v1097 = vunpack.c.l.b16 %v442
    %v1098 = vunpack.c.h.b16 %v442
    %v1099 = vunpack.c.l.b16 %v443
    %v1100 = vunpack.c.h.b16 %v443
    %v1101 = vunpack.c.l.b16 %v444
    %v1102 = vunpack.c.l.b16 %v445
    %v1103 = vunpack.c.h.b16 %v445
    %v1104 = vunpack.c.l.b16 %v446
    %v1105 = vunpack.c.h.b16 %v446
    %v1106 = vunpack.c.l.b16 %v447
    %v1107 = vunpack.c.l.b16 %v448
    %v1108 = vunpack.c.h.b16 %v448
    %v1109 = vunpack.c.l.b16 %v449
    %v1110 = vunpack.c.h.b16 %v449
    %v1111 = vunpack.c.l.b16 %v450
    %v1112 = vunpack.c.l.b16 %v451
    %v1113 = vunpack.c.h.b16 %v451
    %v1114 = vunpack.c.l.b16 %v452
    %v1115 = vunpack.c.h.b16 %v452
    %v1116 = vunpack.c.l.b16 %v453
    %v1117 = vunpack.c.l.b16 %v454
    %v1118 = vunpack.c.h.b16 %v454
    %v1119 = vunpack.c.l.b16 %v455
    %v1120 = vunpack.c.h.b16 %v455
    %v1121 = vunpack.c.l.b16 %v456
    %v1122 = vunpack.c.l.b16 %v457
    %v1123 = vunpack.c.h.b16 %v457
    %v1124 = vunpack.c.l.b16 %v458
    %v1125 = vunpack.c.h.b16 %v458
    %v1126 = vunpack.c.l.b16 %v459
    %v1127 = vunpack.c.l.b16 %v460
    %v1128 = vunpack.c.h.b16 %v460
    %v1129 = vunpack.c.l.b16 %v461
    %v1130 = vunpack.c.h.b16 %v461
    %v1131 = vunpack.c.l.b16 %v462
    %v1132 = vunpack.c.l.b16 %v463
    %v1133 = vunpack.c.h.b16 %v463
    %v1134 = vunpack.c.l.b16 %v464
    %v1135 = vunpack.c.h.b16 %v464
    %v1136 = vunpack.c.l.b16 %v465
    %v1137 = vunpack.c.l.b16 %v466
    %v1138 = vunpack.c.h.b16 %v466
    %v1139 = vunpack.c.l.b16 %v467
    %v1140 = vunpack.c.h.b16 %v467
    %v1141 = vunpack.c.l.b16 %v468
    %v1142 = vunpack.c.l.b16 %v469
    %v1143 = vunpack.c.h.b16 %v469
    %v1144 = vunpack.c.l.b16 %v470
    %v1145 = vunpack.c.h.b16 %v470
    %v1146 = vunpack.c.l.b16 %v471
    %v1147 = vunpack.c.l.b16 %v472
    %v1148 = vunpack.c.h.b16 %v472
    %v1149 = vunpack.c.l.b16 %v473
    %v1150 = vunpack.c.h.b16 %v473
    %v1151 = vunpack.c.l.b16 %v474
    %v1152 = vunpack.c.l.b16 %v475
    %v1153 = vunpack.c.h.b16 %v475
    %v1154 = vunpack.c.l.b16 %v476
    %v1155 = vunpack.c.h.b16 %v476
    %v1156 = vunpack.c.l.b16 %v477
    %v1157 = vunpack.c.l.b16 %v478
    %v1158 = vunpack.c.h.b16 %v478
    %v1159 = vunpack.c.l.b16 %v479
    %v1160 = vunpack.c.h.b16 %v479
    %v1161 = vunpack.c.l.b16 %v480
    %v1162 = vunpack.c.l.b16 %v481
    %v1163 = vunpack.c.h.b16 %v481
    %v1164 = vunpack.c.l.b16 %v482
    %v1165 = vunpack.c.h.b16 %v482
    %v1166 = vunpack.c.l.b16 %v483
    %v1167 = vunpack.c.l.b16 %v484
    %v1168 = vunpack.c.h.b16 %v484
    %v1169 = vunpack.c.l.b16 %v485
    %v1170 = vunpack.c.h.b16 %v485
    %v1171 = vunpack.c.l.b16 %v486
    %v1172 = vunpack.c.l.b16 %v487
    %v1173 = vunpack.c.h.b16 %v487
    %v1174 = vunpack.c.l.b16 %v488
    %v1175 = vunpack.c.h.b16 %v488
    %v1176 = vunpack.c.l.b16 %v489
    %v1177 = vunpack.c.l.b16 %v490
    %v1178 = vunpack.c.h.b16 %v490
    %v1179 = vunpack.c.l.b16 %v491
    %v1180 = vunpack.c.h.b16 %v491
    %v1181 = vunpack.c.l.b16 %v492
    %v1182 = vunpack.c.l.b16 %v493
    %v1183 = vunpack.c.h.b16 %v493
    %v1184 = vunpack.c.l.b16 %v494
    %v1185 = vunpack.c.h.b16 %v494
    %v1186 = vunpack.c.l.b16 %v495
    %v1187 = vunpack.c.l.b16 %v496
    %v1188 = vunpack.c.h.b16 %v496
    %v1189 = vunpack.c.l.b16 %v497
    %v1190 = vunpack.c.h.b16 %v497
    %v1191 = vunpack.c.l.b16 %v498
    %v1192 = vunpack.c.l.b16 %v499
    %v1193 = vunpack.c.h.b16 %v499
    %v1194 = vunpack.c.l.b16 %v500
    %v1195 = vunpack.c.h.b16 %v500
    %v1196 = vunpack.c.l.b16 %v501
    %v1197 = vunpack.c.l.b16 %v502
    %v1198 = vunpack.c.h.b16 %v502
    %v1199 = vunpack.c.l.b16 %v503
    %v1200 = vunpack.c.h.b16 %v503
    %v1201 = vunpack.c.l.b16 %v504
    %v1202 = vunpack.c.l.b16 %v505
    %v1203 = vunpack.c.h.b16 %v505
    %v1204 = vunpack.c.l.b16 %v506
    %v1205 = vunpack.c.h.b16 %v506
    %v1206 = vunpack.c.l.b16 %v507
    %v1207 = vunpack.c.l.b16 %v508
    %v1208 = vunpack.c.h.b16 %v508
    %v1209 = vunpack.c.l.b16 %v509
    %v1210 = vunpack.c.h.b16 %v509
    %v1211 = vunpack.c.l.b16 %v510
    %v1212 = vunpack.c.l.b16 %v511
    %v1213 = vunpack.c.h.b16 %v511
    %v1214 = vunpack.c.l.b16 %v512
    %v1215 = vunpack.c.h.b16 %v512
    %v1216 = vunpack.c.l.b16 %v513
    %v1217 = vunpack.c.l.b16 %v514
    %v1218 = vunpack.c.h.b16 %v514
    %v1219 = vunpack.c.l.b16 %v515
    %v1220 = vunpack.c.h.b16 %v515
    %v1221 = vunpack.c.l.b16 %v516
    %v1222 = vunpack.c.l.b16 %v517
    %v1223 = vunpack.c.h.b16 %v517
    %v1224 = vunpack.c.l.b16 %v518
    %v1225 = vunpack.c.h.b16 %v518
    %v1226 = vunpack.c.l.b16 %v519
    %v1227 = vunpack.c.l.b16 %v520
    %v1228 = vunpack.c.h.b16 %v520
    %v1229 = vunpack.c.l.b16 %v521
    %v1230 = vunpack.c.h.b16 %v521
    %v1231 = vunpack.c.l.b16 %v522
    %v1232 = vunpack.c.l.b16 %v523
    %v1233 = vunpack.c.h.b16 %v523
    %v1234 = vunpack.c.l.b16 %v524
    %v1235 = vunpack.c.h.b16 %v524
    %v1236 = vunpack.c.l.b16 %v525
    %v1237 = vunpack.c.l.b16 %v526
    %v1238 = vunpack.c.h.b16 %v526
    %v1239 = vunpack.c.l.b16 %v527
    %v1240 = vunpack.c.h.b16 %v527
    %v1241 = vunpack.c.l.b16 %v528
    %v1242 = vunpack.c.l.b16 %v529
    %v1243 = vunpack.c.h.b16 %v529
    %v1244 = vunpack.c.l.b16 %v530
    %v1245 = vunpack.c.h.b16 %v530
    %v1246 = vunpack.c.l.b16 %v531
    %v1247 = vunpack.c.l.b16 %v532
    %v1248 = vunpack.c.h.b16 %v532
    %v1249 = vunpack.c.l.b16 %v533
    %v1250 = vunpack.c.h.b16 %v533
    %v1251 = vunpack.c.l.b16 %v534
    %v1252 = vunpack.c.l.b16 %v535
    %v1253 = vunpack.c.h.b16 %v535
    %v1254 = vunpack.c.l.b16 %v536
    %v1255 = vunpack.c.h.b16 %v536
    %v1256 = vunpack.c.l.b16 %v537
    %v1257 = vunpack.c.l.b16 %v538
    %v1258 = vunpack.c.h.b16 %v538
    %v1259 = vunpack.c.l.b16 %v539
    %v1260 = vunpack.c.h.b16 %v539
    %v1261 = vunpack.c.l.b16 %v540
    %v1262 = vunpack.c.l.b16 %v541
    %v1263 = vunpack.c.h.b16 %v541
    %v1264 = vunpack.c.l.b16 %v542
    %v1265 = vunpack.c.h.b16 %v542
    %v1266 = vunpack.c.l.b16 %v543
    %v1267 = vunpack.c.l.b16 %v544
    %v1268 = vunpack.c.h.b16 %v544
    %v1269 = vunpack.c.l.b16 %v545
    %v1270 = vunpack.c.h.b16 %v545
    %v1271 = vunpack.c.l.b16 %v546
    %v1272 = vunpack.c.l.b16 %v547
    %v1273 = vunpack.c.h.b16 %v547
    %v1274 = vunpack.c.l.b16 %v548
    %v1275 = vunpack.c.h.b16 %v548
    %v1276 = vunpack.c.l.b16 %v549
    %v1277 = vunpack.c.l.b16 %v550
    %v1278 = vunpack.c.h.b16 %v550
    %v1279 = vunpack.c.l.b16 %v551
    %v1280 = vunpack.c.h.b16 %v551
    %v1281 = vunpack.c.l.b16 %v552
    %v1282 = vunpack.c.l.b16 %v553
    %v1283 = vunpack.c.h.b16 %v553
    %v1284 = vunpack.c.l.b16 %v554
    %v1285 = vunpack.c.h.b16 %v554
    %v1286 = vunpack.c.l.b16 %v555
    %v1287 = vunpack.c.l.b16 %v556
    %v1288 = vunpack.c.h.b16 %v556
    %v1289 = vunpack.c.l.b16 %v557
    %v1290 = vunpack.c.h.b16 %v557
    %v1291 = vunpack.c.l.b16 %v558
    %v1292 = vunpack.c.l.b16 %v559
    %v1293 = vunpack.c.h.b16 %v559
    %v1294 = vunpack.c.l.b16 %v560
    %v1295 = vunpack.c.h.b16 %v560
    %v1296 = vunpack.c.l.b16 %v561
    %v1297 = vunpack.c.l.b16 %v562
    %v1298 = vunpack.c.h.b16 %v562
    %v1299 = vunpack.c.l.b16 %v563
    %v1300 = vunpack.c.h.b16 %v563
    %v1301 = vunpack.c.l.b16 %v564
    %v1302 = vunpack.c.l.b16 %v565
    %v1303 = vunpack.c.h.b16 %v565
    %v1304 = vunpack.c.l.b16 %v566
    %v1305 = vunpack.c.h.b16 %v566
    %v1306 = vunpack.c.l.b16 %v567
    %v1307 = vunpack.c.l.b16 %v568
    %v1308 = vunpack.c.h.b16 %v568
    %v1309 = vunpack.c.l.b16 %v569
    %v1310 = vunpack.c.h.b16 %v569
    %v1311 = vunpack.c.l.b16 %v570
    %v1312 = vunpack.c.l.b16 %v571
    %v1313 = vunpack.c.h.b16 %v571
    %v1314 = vunpack.c.l.b16 %v572
    %v1315 = vunpack.c.h.b16 %v572
    %v1316 = vunpack.c.l.b16 %v573
    %v1317 = vunpack.c.l.b16 %v574
    %v1318 = vunpack.c.h.b16 %v574
    %v1319 = vunpack.c.l.b16 %v575
    %v1320 = vunpack.c.h.b16 %v575
    %v1321 = vunpack.c.l.b16 %v576
    %v1322 = vunpack.c.l.b16 %v577
    %v1323 = vunpack.c.h.b16 %v577
    %v1324 = vunpack.c.l.b16 %v578
    %v1325 = vunpack.c.h.b16 %v578
    %v1326 = vunpack.c.l.b16 %v579
    %v1327 = vunpack.c.l.b16 %v580
    %v1328 = vunpack.c.h.b16 %v580
    %v1329 = vunpack.c.l.b16 %v581
    %v1330 = vunpack.c.h.b16 %v581
    %v1331 = vunpack.c.l.b16 %v582
    %v1332 = vunpack.c.l.b16 %v583
    %v1333 = vunpack.c.h.b16 %v583
    %v1334 = vunpack.c.l.b16 %v584
    %v1335 = vunpack.c.h.b16 %v584
    %v1336 = vunpack.c.l.b16 %v585
    %v1337 = vunpack.c.l.b16 %v586
    %v1338 = vunpack.c.h.b16 %v586
    %v1339 = vunpack.c.l.b16 %v587
    %v1340 = vunpack.c.h.b16 %v587
    %v1341 = vunpack.c.l.b16 %v588
    %v1342 = vunpack.c.l.b16 %v589
    %v1343 = vunpack.c.h.b16 %v589
    %v1344 = vunpack.c.l.b16 %v590
    %v1345 = vunpack.c.h.b16 %v590
    %v1346 = vunpack.c.l.b16 %v591
    %v1347 = vunpack.c.l.b16 %v592
    %v1348 = vunpack.c.h.b16 %v592
    %v1349 = vunpack.c.l.b16 %v593
    %v1350 = vunpack.c.h.b16 %v593
    %v1351 = vunpack.c.l.b16 %v594
    %v1352 = vunpack.c.l.b16 %v595
    %v1353 = vunpack.c.h.b16 %v595
    %v1354 = vunpack.c.l.b16 %v596
    %v1355 = vunpack.c.h.b16 %v596
    %v1356 = vunpack.c.l.b16 %v597
    %v1357 = vunpack.c.l.b16 %v598
    %v1358 = vunpack.c.h.b16 %v598
    %v1359 = vunpack.c.l.b16 %v599
    %v1360 = vunpack.c.h.b16 %v599
    %v1361 = vunpack.c.l.b16 %v600
    %v1362 = vunpack.c.l.b16 %v601
    %v1363 = vunpack.c.h.b16 %v601
    %v1364 = vunpack.c.l.b16 %v602
    %v1365 = vunpack.c.h.b16 %v602
    %v1366 = vunpack.c.l.b16 %v603
    %v1367 = vunpack.c.l.b16 %v604
    %v1368 = vunpack.c.h.b16 %v604
    %v1369 = vunpack.c.l.b16 %v605
    %v1370 = vunpack.c.h.b16 %v605
    %v1371 = vunpack.c.l.b16 %v606
    %v1372 = vunpack.c.l.b16 %v607
    %v1373 = vunpack.c.h.b16 %v607
    %v1374 = vunpack.c.l.b16 %v608
    %v1375 = vunpack.c.h.b16 %v608
    %v1376 = vunpack.c.l.b16 %v609
    %v1377 = vunpack.c.l.b16 %v610
    %v1378 = vunpack.c.h.b16 %v610
    %v1379 = vunpack.c.l.b16 %v611
    %v1380 = vunpack.c.h.b16 %v611
    %v1381 = vunpack.c.l.b16 %v612
    %v1382 = vunpack.c.l.b16 %v613
    %v1383 = vunpack.c.h.b16 %v613
    %v1384 = vunpack.c.l.b16 %v614
    %v1385 = vunpack.c.h.b16 %v614
    %v1386 = vunpack.c.l.b16 %v615
    %v1387 = vunpack.c.l.b16 %v616
    %v1388 = vunpack.c.h.b16 %v616
    %v1389 = vunpack.c.l.b16 %v617
    %v1390 = vunpack.c.h.b16 %v617
    %v1391 = vunpack.c.l.b16 %v618
    %v1392 = vunpack.c.l.b16 %v619
    %v1393 = vunpack.c.h.b16 %v619
    %v1394 = vunpack.c.l.b16 %v620
    %v1395 = vunpack.c.h.b16 %v620
    %v1396 = vunpack.c.l.b16 %v621
    %v1397 = vunpack.c.l.b16 %v622
    %v1398 = vunpack.c.h.b16 %v622
    %v1399 = vunpack.c.l.b16 %v623
    %v1400 = vunpack.c.h.b16 %v623
    %v1401 = vunpack.c.l.b16 %v624
    %v1402 = vunpack.c.l.b16 %v625
    %v1403 = vunpack.c.h.b16 %v625
    %v1404 = vunpack.c.l.b16 %v626
    %v1405 = vunpack.c.h.b16 %v626
    %v1406 = vunpack.c.l.b16 %v627
    %v1407 = vunpack.c.l.b16 %v628
    %v1408 = vunpack.c.h.b16 %v628
    %v1409 = vunpack.c.l.b16 %v629
    %v1410 = vunpack.c.h.b16 %v629
    %v1411 = vunpack.c.l.b16 %v630
    %v1412 = vunpack.c.l.b16 %v631
    %v1413 = vunpack.c.h.b16 %v631
    %v1414 = vunpack.c.l.b16 %v632
    %v1415 = vunpack.c.h.b16 %v632
    %v1416 = vunpack.c.l.b16 %v633
    %v1417 = vunpack.c.l.b16 %v634
    %v1418 = vunpack.c.h.b16 %v634
    %v1419 = vunpack.c.l.b16 %v635
    %v1420 = vunpack.c.h.b16 %v635
    %v1421 = vunpack.c.l.b16 %v636
    %v1422 = vunpack.c.l.b16 %v637
    %v1423 = vunpack.c.h.b16 %v637
    %v1424 = vunpack.c.l.b16 %v638
    %v1425 = vunpack.c.h.b16 %v638
    %v1426 = vunpack.c.l.b16 %v639
    %v1427 = vunpack.c.l.b16 %v640
    %v1428 = vunpack.c.h.b16 %v640
    %v1429 = vunpack.c.l.b16 %v641
    %v1430 = vunpack.c.h.b16 %v641
    %v1431 = vunpack.c.l.b16 %v642
    %v1432 = vunpack.c.l.b16 %v643
    %v1433 = vunpack.c.h.b16 %v643
    %v1434 = vunpack.c.l.b16 %v644
    %v1435 = vunpack.c.h.b16 %v644
    %v1436 = vunpack.c.l.b16 %v645
    %v1437 = vunpack.c.l.b16 %v646
    %v1438 = vunpack.c.h.b16 %v646
    %v1439 = vunpack.c.l.b16 %v647
    %v1440 = vunpack.c.h.b16 %v647
    %v1441 = vunpack.c.l.b16 %v648
    %v1442 = vunpack.c.l.b16 %v649
    %v1443 = vunpack.c.h.b16 %v649
    %v1444 = vunpack.c.l.b16 %v650
    %v1445 = vunpack.c.h.b16 %v650
    %v1446 = vunpack.c.l.b16 %v651
    %v1447 = vunpack.c.l.b16 %v652
    %v1448 = vunpack.c.h.b16 %v652
    %v1449 = vunpack.c.l.b16 %v653
    %v1450 = vunpack.c.h.b16 %v653
    %v1451 = vunpack.c.l.b16 %v654
    %v1452 = vunpack.c.l.b16 %v655
    %v1453 = vunpack.c.h.b16 %v655
    %v1454 = vunpack.c.l.b16 %v656
    %v1455 = vunpack.c.h.b16 %v656
    %v1456 = vunpack.c.l.b16 %v657
    %v1457 = vunpack.c.l.b16 %v658
    %v1458 = vunpack.c.h.b16 %v658
    %v1459 = vunpack.c.l.b16 %v659
    %v1460 = vunpack.c.h.b16 %v659
    %v1461 = vunpack.c.l.b16 %v660
    %v1462 = vunpack.c.l.b16 %v661
    %v1463 = vunpack.c.h.b16 %v661
    %v1464 = vunpack.c.l.b16 %v662
    %v1465 = vunpack.c.h.b16 %v662
    %v1466 = vunpack.c.l.b16 %v663
    %v1467 = vunpack.c.l.b16 %v664
    %v1468 = vunpack.c.h.b16 %v664
    %v1469 = vunpack.c.l.b16 %v665
    %v1470 = vunpack.c.h.b16 %v665
    %v1471 = vunpack.c.l.b16 %v666
    %v1472 = vunpack.c.l.b16 %v667
    %v1473 = vunpack.c.h.b16 %v667
    %v1474 = vunpack.c.l.b16 %v668
    %v1475 = vunpack.c.h.b16 %v668
    %v1476 = vunpack.c.l.b16 %v669
    %v1477 = vunpack.c.l.b16 %v670
    %v1478 = vunpack.c.h.b16 %v670
    %v1479 = vunpack.c.l.b16 %v671
    %v1480 = vunpack.c.h.b16 %v671
    %v1481 = vunpack.c.l.b16 %v672
    %v1482 = vunpack.c.l.b16 %v673
    %v1483 = vunpack.c.h.b16 %v673
    %v1484 = vunpack.c.l.b16 %v674
    %v1485 = vunpack.c.h.b16 %v674
    %v1486 = vunpack.c.l.b16 %v675
    %v1487 = vunpack.c.l.b16 %v676
    %v1488 = vunpack.c.h.b16 %v676
    %v1489 = vunpack.c.l.b16 %v677
    %v1490 = vunpack.c.h.b16 %v677
    %v1491 = vunpack.c.l.b16 %v678
    %v1492 = vunpack.c.l.b16 %v679
    %v1493 = vunpack.c.h.b16 %v679
    %v1494 = vunpack.c.l.b16 %v680
    %v1495 = vunpack.c.h.b16 %v680
    %v1496 = vunpack.c.l.b16 %v681
    %v1497 = vunpack.c.l.b16 %v682
    %v1498 = vunpack.c.h.b16 %v682
    %v1499 = vunpack.c.l.b16 %v683
    %v1500 = vunpack.c.h.b16 %v683
    %v1501 = vunpack.c.l.b16 %v684
    %v1502 = vunpack.c.l.b16 %v685
    %v1503 = vunpack.c.h.b16 %v685
    %v1504 = vunpack.c.l.b16 %v686
    %v1505 = vunpack.c.h.b16 %v686
    %v1506 = vunpack.c.l.b16 %v687
    %v1507 = vunpack.c.l.b16 %v688
    %v1508 = vunpack.c.h.b16 %v688
    %v1509 = vunpack.c.l.b16 %v689
    %v1510 = vunpack.c.h.b16 %v689
    %v1511 = vunpack.c.l.b16 %v690
    %v1512 = vunpack.c.l.b16 %v691
    %v1513 = vunpack.c.h.b16 %v691
    %v1514 = vunpack.c.l.b16 %v692
    %v1515 = vunpack.c.h.b16 %v692
    %v1516 = vunpack.c.l.b16 %v693
    %v1517 = vunpack.c.l.b16 %v694
    %v1518 = vunpack.c.h.b16 %v694
    %v1519 = vunpack.c.l.b16 %v695
    %v1520 = vunpack.c.h.b16 %v695
    %v1521 = vunpack.c.l.b16 %v696
    %v1522 = vunpack.c.l.b16 %v697
    %v1523 = vunpack.c.h.b16 %v697
    %v1524 = vunpack.c.l.b16 %v698
    %v1525 = vunpack.c.h.b16 %v698
    %v1526 = vunpack.c.l.b16 %v699
    %v1527 = vpack.c.b16 %v1032, %v1027
    %v1528 = vpack.c.b16 %v1033, %v1028
    %v1529 = vpack.c.b16 %v1034, %v1029
    %v1530 = vpack.c.b16 %v1035, %v1030
    %v1531 = vpack.c.b16 %v1036, %v1031
    %v1532 = vpack.c.b16 %v1042, %v1037
    %v1533 = vpack.c.b16 %v1043, %v1038
    %v1534 = vpack.c.b16 %v1044, %v1039
    %v1535 = vpack.c.b16 %v1045, %v1040
    %v1536 = vpack.c.b16 %v1046, %v1041
    %v1537 = vpack.c.b16 %v1052, %v1047
    %v1538 = vpack.c.b16 %v1053, %v1048
    %v1539 = vpack.c.b16 %v1054, %v1049
    %v1540 = vpack.c.b16 %v1055, %v1050
    %v1541 = vpack.c.b16 %v1056, %v1051
    %v1542 = vpack.c.b16 %v1062, %v1057
    %v1543 = vpack.c.b16 %v1063, %v1058
    %v1544 = vpack.c.b16 %v1064, %v1059
    %v1545 = vpack.c.b16 %v1065, %v1060
    %v1546 = vpack.c.b16 %v1066, %v1061
    %v1547 = vpack.c.b16 %v1072, %v1067
    %v1548 = vpack.c.b16 %v1073, %v1068
    %v1549 = vpack.c.b16 %v1074, %v1069
    %v1550 = vpack.c.b16 %v1075, %v1070
    %v1551 = vpack.c.b16 %v1076, %v1071
    %v1552 = vpack.c.b16 %v1082, %v1077
    %v1553 = vpack.c.b16 %v1083, %v1078
    %v1554 = vpack.c.b16 %v1084, %v1079
    %v1555 = vpack.c.b16 %v1085, %v1080
    %v1556 = vpack.c.b16 %v1086, %v1081
    %v1557 = vpack.c.b16 %v1092, %v1087
    %v1558 = vpack.c.b16 %v1093, %v1088
    %v1559 = vpack.c.b16 %v1094, %v1089
    %v1560 = vpack.c.b16 %v1095, %v1090
    %v1561 = vpack.c.b16 %v1096, %v1091
    %v1562 = vpack.c.b16 %v1102, %v1097
    %v1563 = vpack.c.b16 %v1103, %v1098
    %v1564 = vpack.c.b16 %v1104, %v1099
    %v1565 = vpack.c.b16 %v1105, %v1100
    %v1566 = vpack.c.b16 %v1106, %v1101
    %v1567 = vpack.c.b16 %v1112, %v1107
    %v1568 = vpack.c.b16 %v1113, %v1108
    %v1569 = vpack.c.b16 %v1114, %v1109
    %v1570 = vpack.c.b16 %v1115, %v1110
    %v1571 = vpack.c.b16 %v1116, %v1111
    %v1572 = vpack.c.b16 %v1122, %v1117
    %v1573 = vpack.c.b16 %v1123, %v1118
    %v1574 = vpack.c.b16 %v1124, %v1119
    %v1575 = vpack.c.b16 %v1125, %v1120
    %v1576 = vpack.c.b16 %v1126, %v1121
    %v1577 = vpack.c.b16 %v1132, %v1127
    %v1578 = vpack.c.b16 %v1133, %v1128
    %v1579 = vpack.c.b16 %v1134, %v1129
    %v1580 = vpack.c.b16 %v1135, %v1130
    %v1581 = vpack.c.b16 %v1136, %v1131
    %v1582 = vpack.c.b16 %v1142, %v1137
    %v1583 = vpack.c.b16 %v1143, %v1138
    %v1584 = vpack.c.b16 %v1144, %v1139
    %v1585 = vpack.c.b16 %v1145, %v1140
    %v1586 = vpack.c.b16 %v1146, %v1141
    %v1587 = vpack.c.b16 %v1152, %v1147
    %v1588 = vpack.c.b16 %v1153, %v1148
    %v1589 = vpack.c.b16 %v1154, %v1149
    %v1590 = vpack.c.b16 %v1155, %v1150
    %v1591 = vpack.c.b16 %v1156, %v1151
    %v1592 = vpack.c.b16 %v1162, %v1157
    %v1593 = vpack.c.b16 %v1163, %v1158
    %v1594 = vpack.c.b16 %v1164, %v1159
    %v1595 = vpack.c.b16 %v1165, %v1160
    %v1596 = vpack.c.b16 %v1166, %v1161
    %v1597 = vpack.c.b16 %v1172, %v1167
    %v1598 = vpack.c.b16 %v1173, %v1168
    %v1599 = vpack.c.b16 %v1174, %v1169
    %v1600 = vpack.c.b16 %v1175, %v1170
    %v1601 = vpack.c.b16 %v1176, %v1171
    %v1602 = vpack.c.b16 %v1182, %v1177
    %v1603 = vpack.c.b16 %v1183, %v1178
    %v1604 = vpack.c.b16 %v1184, %v1179
    %v1605 = vpack.c.b16 %v1185, %v1180
    %v1606 = vpack.c.b16 %v1186, %v1181
    %v1607 = vpack.c.b16 %v1192, %v1187
    %v1608 = vpack.c.b16 %v1193, %v1188
    %v1609 = vpack.c.b16 %v1194, %v1189
    %v1610 = vpack.c.b16 %v1195, %v1190
    %v1611 = vpack.c.b16 %v1196, %v1191
    %v1612 = vpack.c.b16 %v1202, %v1197
    %v1613 = vpack.c.b16 %v1203, %v1198
    %v1614 = vpack.c.b16 %v1204, %v1199
    %v1615 = vpack.c.b16 %v1205, %v1200
    %v1616 = vpack.c.b16 %v1206, %v1201
    %v1617 = vpack.c.b16 %v1212, %v1207
    %v1618 = vpack.c.b16 %v1213, %v1208
    %v1619 = vpack.c.b16 %v1214, %v1209
    %v1620 = vpack.c.b16 %v1215, %v1210
    %v1621 = vpack.c.b16 %v1216, %v1211
    %v1622 = vpack.c.b16 %v1222, %v1217
    %v1623 = vpack.c.b16 %v1223, %v1218
    %v1624 = vpack.c.b16 %v1224, %v1219
    %v1625 = vpack.c.b16 %v1225, %v1220
    %v1626 = vpack.c.b16 %v1226, %v1221
    %v1627 = vpack.c.b16 %v1232, %v1227
    %v1628 = vpack.c.b16 %v1233, %v1228
    %v1629 = vpack.c.b16 %v1234, %v1229
    %v1630 = vpack.c.b16 %v1235, %v1230
    %v1631 = vpack.c.b16 %v1236, %v1231
    %v1632 = vpack.c.b16 %v1242, %v1237
    %v1633 = vpack.c.b16 %v1243, %v1238
    %v1634 = vpack.c.b16 %v1244, %v1239
    %v1635 = vpack.c.b16 %v1245, %v1240
    %v1636 = vpack.c.b16 %v1246, %v1241
    %v1637 = vpack.c.b16 %v1252, %v1247
    %v1638 = vpack.c.b16 %v1253, %v1248
    %v1639 = vpack.c.b16 %v1254, %v1249
    %v1640 = vpack.c.b16 %v1255, %v1250
    %v1641 = vpack.c.b16 %v1256, %v1251
    %v1642 = vpack.c.b16 %v1262, %v1257
    %v1643 = vpack.c.b16 %v1263, %v1258
    %v1644 = vpack.c.b16 %v1264, %v1259
    %v1645 = vpack.c.b16 %v1265, %v1260
    %v1646 = vpack.c.b16 %v1266, %v1261
    %v1647 = vpack.c.b16 %v1272, %v1267
    %v1648 = vpack.c.b16 %v1273, %v1268
    %v1649 = vpack.c.b16 %v1274, %v1269
    %v1650 = vpack.c.b16 %v1275, %v1270
    %v1651 = vpack.c.b16 %v1276, %v1271
    %v1652 = vpack.c.b16 %v1282, %v1277
    %v1653 = vpack.c.b16 %v1283, %v1278
    %v1654 = vpack.c.b16 %v1284, %v1279
    %v1655 = vpack.c.b16 %v1285, %v1280
    %v1656 = vpack.c.b16 %v1286, %v1281
    %v1657 = vpack.c.b16 %v1292, %v1287
    %v1658 = vpack.c.b16 %v1293, %v1288
    %v1659 = vpack.c.b16 %v1294, %v1289
    %v1660 = vpack.c.b16 %v1295, %v1290
    %v1661 = vpack.c.b16 %v1296, %v1291
    %v1662 = vpack.c.b16 %v1302, %v1297
    %v1663 = vpack.c.b16 %v1303, %v1298
    %v1664 = vpack.c.b16 %v1304, %v1299
    %v1665 = vpack.c.b16 %v1305, %v1300
    %v1666 = vpack.c.b16 %v1306, %v1301
    %v1667 = vpack.c.b16 %v1312, %v1307
    %v1668 = vpack.c.b16 %v1313, %v1308
    %v1669 = vpack.c.b16 %v1314, %v1309
    %v1670 = vpack.c.b16 %v1315, %v1310
    %v1671 = vpack.c.b16 %v1316, %v1311
    %v1672 = vpack.c.b16 %v1322, %v1317
    %v1673 = vpack.c.b16 %v1323, %v1318
    %v1674 = vpack.c.b16 %v1324, %v1319
    %v1675 = vpack.c.b16 %v1325, %v1320
    %v1676 = vpack.c.b16 %v1326, %v1321
    %v1677 = vpack.c.b16 %v1332, %v1327
    %v1678 = vpack.c.b16 %v1333, %v1328
    %v1679 = vpack.c.b16 %v1334, %v1329
    %v1680 = vpack.c.b16 %v1335, %v1330
    %v1681 = vpack.c.b16 %v1336, %v1331
    %v1682 = vpack.c.b16 %v1342, %v1337
    %v1683 = vpack.c.b16 %v1343, %v1338
    %v1684 = vpack.c.b16 %v1344, %v1339
    %v1685 = vpack.c.b16 %v1345, %v1340
    %v1686 = vpack.c.b16 %v1346, %v1341
    %v1687 = vpack.c.b16 %v1352, %v1347
    %v1688 = vpack.c.b16 %v1353, %v1348
    %v1689 = vpack.c.b16 %v1354, %v1349
    %v1690 = vpack.c.b16 %v1355, %v1350
    %v1691 = vpack.c.b16 %v1356, %v1351
    %v1692 = vpack.c.b16 %v1362, %v1357
    %v1693 = vpack.c.b16 %v1363, %v1358
    %v1694 = vpack.c.b16 %v1364, %v1359
    %v1695 = vpack.c.b16 %v1365, %v1360
    %v1696 = vpack.c.b16 %v1366, %v1361
    %v1697 = vpack.c.b16 %v1372, %v1367
    %v1698 = vpack.c.b16 %v1373, %v1368
    %v1699 = vpack.c.b16 %v1374, %v1369
    %v1700 = vpack.c.b16 %v1375, %v1370
    %v1701 = vpack.c.b16 %v1376, %v1371
    %v1702 = vpack.c.b16 %v1382, %v1377
    %v1703 = vpack.c.b16 %v1383, %v1378
    %v1704 = vpack.c.b16 %v1384, %v1379
    %v1705 = vpack.c.b16 %v1385, %v1380
    %v1706 = vpack.c.b16 %v1386, %v1381
    %v1707 = vpack.c.b16 %v1392, %v1387
    %v1708 = vpack.c.b16 %v1393, %v1388
    %v1709 = vpack.c.b16 %v1394, %v1389
    %v1710 = vpack.c.b16 %v1395, %v1390
    %v1711 = vpack.c.b16 %v1396, %v1391
    %v1712 = vpack.c.b16 %v1402, %v1397
    %v1713 = vpack.c.b16 %v1403, %v1398
    %v1714 = vpack.c.b16 %v1404, %v1399
    %v1715 = vpack.c.b16 %v1405, %v1400
    %v1716 = vpack.c.b16 %v1406, %v1401
    %v1717 = vpack.c.b16 %v1412, %v1407
    %v1718 = vpack.c.b16 %v1413, %v1408
    %v1719 = vpack.c.b16 %v1414, %v1409
    %v1720 = vpack.c.b16 %v1415, %v1410
    %v1721 = vpack.c.b16 %v1416, %v1411
    %v1722 = vpack.c.b16 %v1422, %v1417
    %v1723 = vpack.c.b16 %v1423, %v1418
    %v1724 = vpack.c.b16 %v1424, %v1419
    %v1725 = vpack.c.b16 %v1425, %v1420
    %v1726 = vpack.c.b16 %v1426, %v1421
    %v1727 = vpack.c.b16 %v1432, %v1427
    %v1728 = vpack.c.b16 %v1433, %v1428
    %v1729 = vpack.c.b16 %v1434, %v1429
    %v1730 = vpack.c.b16 %v1435, %v1430
    %v1731 = vpack.c.b16 %v1436, %v1431
    %v1732 = vpack.c.b16 %v1442, %v1437
    %v1733 = vpack.c.b16 %v1443, %v1438
    %v1734 = vpack.c.b16 %v1444, %v1439
    %v1735 = vpack.c.b16 %v1445, %v1440
    %v1736 = vpack.c.b16 %v1446, %v1441
    %v1737 = vpack.c.b16 %v1452, %v1447
    %v1738 = vpack.c.b16 %v1453, %v1448
    %v1739 = vpack.c.b16 %v1454, %v1449
    %v1740 = vpack.c.b16 %v1455, %v1450
    %v1741 = vpack.c.b16 %v1456, %v1451
    %v1742 = vpack.c.b16 %v1462, %v1457
    %v1743 = vpack.c.b16 %v1463, %v1458
    %v1744 = vpack.c.b16 %v1464, %v1459
    %v1745 = vpack.c.b16 %v1465, %v1460
    %v1746 = vpack.c.b16 %v1466, %v1461
    %v1747 = vpack.c.b16 %v1472, %v1467
    %v1748 = vpack.c.b16 %v1473, %v1468
    %v1749 = vpack.c.b16 %v1474, %v1469
    %v1750 = vpack.c.b16 %v1475, %v1470
    %v1751 = vpack.c.b16 %v1476, %v1471
    %v1752 = vpack.c.b16 %v1482, %v1477
    %v1753 = vpack.c.b16 %v1483, %v1478
    %v1754 = vpack.c.b16 %v1484, %v1479
    %v1755 = vpack.c.b16 %v1485, %v1480
    %v1756 = vpack.c.b16 %v1486, %v1481
    %v1757 = vpack.c.b16 %v1492, %v1487
    %v1758 = vpack.c.b16 %v1493, %v1488
    %v1759 = vpack.c.b16 %v1494, %v1489
    %v1760 = vpack.c.b16 %v1495, %v1490
    %v1761 = vpack.c.b16 %v1496, %v1491
    %v1762 = vpack.c.b16 %v1502, %v1497
    %v1763 = vpack.c.b16 %v1503, %v1498
    %v1764 = vpack.c.b16 %v1504, %v1499
    %v1765 = vpack.c.b16 %v1505, %v1500
    %v1766 = vpack.c.b16 %v1506, %v1501
    %v1767 = vpack.c.b16 %v1512, %v1507
    %v1768 = vpack.c.b16 %v1513, %v1508
    %v1769 = vpack.c.b16 %v1514, %v1509
    %v1770 = vpack.c.b16 %v1515, %v1510
    %v1771 = vpack.c.b16 %v1516, %v1511
    %v1772 = vpack.c.b16 %v1522, %v1517
    %v1773 = vpack.c.b16 %v1523, %v1518
    %v1774 = vpack.c.b16 %v1524, %v1519
    %v1775 = vpack.c.b16 %v1525, %v1520
    %v1776 = vpack.c.b16 %v1526, %v1521
    %vm2027 = vcmask 261120
    %v2029 = vsel %vm2027, %v399, 0
    %2031 = vmatprep.subr.bf16.mxu0 %v1563
    %2032 = vmatpush1.bf16.msra.mxu0 %v1562
    %2033 = vmatprep.subr.bf16.mxu0 %v1558
    %2034 = vmatpush1.bf16.msra.mxu0 %v1557
    %2035 = vmatprep.subr.bf16.mxu0 %v1553
    %2036 = vmatpush1.bf16.msra.mxu0 %v1552
    %2037 = vmatprep.subr.bf16.mxu0 %v1548
    %2038 = vmatpush1.bf16.msra.mxu0 %v1547
    %2039 = vmatprep.subr.bf16.mxu0 %v1543
    %2040 = vmatpush1.bf16.msra.mxu0 %v1542
    %2041 = vmatprep.subr.bf16.mxu0 %v1538
    %2042 = vmatpush1.bf16.msra.mxu0 %v1537
    %2043 = vmatprep.subr.bf16.mxu0 %v1533
    %2044 = vmatpush1.bf16.msra.mxu0 %v1532
    %2045 = vmatprep.subr.bf16.mxu0 %v1528
    %2046 = vmatpush1.bf16.msra.mxu0 %v1527
    %2047 = vmatprep.subr.bf16.mxu0 %v1603
    %2048 = vmatpush2.bf16.msra.mxu0 %v1602
    %2049 = vmatprep.subr.bf16.mxu0 %v1598
    %2050 = vmatpush2.bf16.msra.mxu0 %v1597
    %2051 = vmatprep.subr.bf16.mxu0 %v1593
    %2052 = vmatpush2.bf16.msra.mxu0 %v1592
    %2053 = vmatprep.subr.bf16.mxu0 %v1588
    %2054 = vmatpush2.bf16.msra.mxu0 %v1587
    %2055 = vmatprep.subr.bf16.mxu0 %v1583
    %2056 = vmatpush2.bf16.msra.mxu0 %v1582
    %2057 = vmatprep.subr.bf16.mxu0 %v1578
    %2058 = vmatpush2.bf16.msra.mxu0 %v1577
    %2059 = vmatprep.subr.bf16.mxu0 %v1573
    %2060 = vmatpush2.bf16.msra.mxu0 %v1572
    %2061 = vmatprep.subr.bf16.mxu0 %v1568
    %2062 = vmatpush2.bf16.msra.mxu0 %v1567
    %2063 = vmatprep.mubr.bf16.mxu0 %v394
    %2064 = vmatmul.mubr.bf16.gmra.mxu0 %v393
    %v2065 = vpop.f32.mrf.mxu0
    %v2066 = vadd.f32 %v705, %v2065
    %v2067 = vpop.f32.mrf.mxu0
    %v2068 = vadd.f32 %v709, %v2067
    %v2069 = vpop.f32.mrf.mxu0
    %v2070 = vpop.f32.mrf.mxu0
    %2071 = vdwg.mxu0
    %2072 = vmatprep.subr.bf16.mxu0 %v1643
    %2073 = vmatpush1.bf16.msra.mxu0 %v1642
    %2074 = vmatprep.subr.bf16.mxu0 %v1638
    %2075 = vmatpush1.bf16.msra.mxu0 %v1637
    %2076 = vmatprep.subr.bf16.mxu0 %v1633
    %2077 = vmatpush1.bf16.msra.mxu0 %v1632
    %2078 = vmatprep.subr.bf16.mxu0 %v1628
    %2079 = vmatpush1.bf16.msra.mxu0 %v1627
    %2080 = vmatprep.subr.bf16.mxu0 %v1623
    %2081 = vmatpush1.bf16.msra.mxu0 %v1622
    %2082 = vmatprep.subr.bf16.mxu0 %v1618
    %2083 = vmatpush1.bf16.msra.mxu0 %v1617
    %2084 = vmatprep.subr.bf16.mxu0 %v1613
    %2085 = vmatpush1.bf16.msra.mxu0 %v1612
    %2086 = vmatprep.subr.bf16.mxu0 %v1608
    %2087 = vmatpush1.bf16.msra.mxu0 %v1607
    %2088 = vmatprep.subr.bf16.mxu0 %v1683
    %2089 = vmatpush2.bf16.msra.mxu0 %v1682
    %2090 = vmatprep.subr.bf16.mxu0 %v1678
    %2091 = vmatpush2.bf16.msra.mxu0 %v1677
    %2092 = vmatprep.subr.bf16.mxu0 %v1673
    %2093 = vmatpush2.bf16.msra.mxu0 %v1672
    %2094 = vmatprep.subr.bf16.mxu0 %v1668
    %2095 = vmatpush2.bf16.msra.mxu0 %v1667
    %2096 = vmatprep.subr.bf16.mxu0 %v1663
    %2097 = vmatpush2.bf16.msra.mxu0 %v1662
    %2098 = vmatprep.subr.bf16.mxu0 %v1658
    %2099 = vmatpush2.bf16.msra.mxu0 %v1657
    %2100 = vmatprep.subr.bf16.mxu0 %v1653
    %2101 = vmatpush2.bf16.msra.mxu0 %v1652
    %2102 = vmatprep.subr.bf16.mxu0 %v1648
    %2103 = vmatpush2.bf16.msra.mxu0 %v1647
    %2104 = vmatprep.mubr.bf16.mxu0 %v396
    %2105 = vmatmul.mubr.bf16.gmra.mxu0 %v395
    %v2106 = vpop.f32.mrf.mxu0
    %v2107 = vadd.f32 %v2066, %v2106
    %v2108 = vpop.f32.mrf.mxu0
    %v2109 = vadd.f32 %v2068, %v2108
    %v2110 = vpop.f32.mrf.mxu0
    %v2111 = vpop.f32.mrf.mxu0
    %2112 = vdwg.mxu0
    %2113 = vmatprep.subr.bf16.mxu0 %v1723
    %2114 = vmatpush1.bf16.msra.mxu0 %v1722
    %2115 = vmatprep.subr.bf16.mxu0 %v1718
    %2116 = vmatpush1.bf16.msra.mxu0 %v1717
    %2117 = vmatprep.subr.bf16.mxu0 %v1713
    %2118 = vmatpush1.bf16.msra.mxu0 %v1712
    %2119 = vmatprep.subr.bf16.mxu0 %v1708
    %2120 = vmatpush1.bf16.msra.mxu0 %v1707
    %2121 = vmatprep.subr.bf16.mxu0 %v1703
    %2122 = vmatpush1.bf16.msra.mxu0 %v1702
    %2123 = vmatprep.subr.bf16.mxu0 %v1698
    %2124 = vmatpush1.bf16.msra.mxu0 %v1697
    %2125 = vmatprep.subr.bf16.mxu0 %v1693
    %2126 = vmatpush1.bf16.msra.mxu0 %v1692
    %2127 = vmatprep.subr.bf16.mxu0 %v1688
    %2128 = vmatpush1.bf16.msra.mxu0 %v1687
    %2129 = vmatprep.subr.bf16.mxu0 %v1763
    %2130 = vmatpush2.bf16.msra.mxu0 %v1762
    %2131 = vmatprep.subr.bf16.mxu0 %v1758
    %2132 = vmatpush2.bf16.msra.mxu0 %v1757
    %2133 = vmatprep.subr.bf16.mxu0 %v1753
    %2134 = vmatpush2.bf16.msra.mxu0 %v1752
    %2135 = vmatprep.subr.bf16.mxu0 %v1748
    %2136 = vmatpush2.bf16.msra.mxu0 %v1747
    %2137 = vmatprep.subr.bf16.mxu0 %v1743
    %2138 = vmatpush2.bf16.msra.mxu0 %v1742
    %2139 = vmatprep.subr.bf16.mxu0 %v1738
    %2140 = vmatpush2.bf16.msra.mxu0 %v1737
    %2141 = vmatprep.subr.bf16.mxu0 %v1733
    %2142 = vmatpush2.bf16.msra.mxu0 %v1732
    %2143 = vmatprep.subr.bf16.mxu0 %v1728
    %2144 = vmatpush2.bf16.msra.mxu0 %v1727
    %2145 = vmatprep.mubr.bf16.mxu0 %v398
    %2146 = vmatmul.mubr.bf16.gmra.mxu0 %v397
    %v2147 = vpop.f32.mrf.mxu0
    %v2148 = vadd.f32 %v2107, %v2147
    %v2149 = vpop.f32.mrf.mxu0
    %v2150 = vadd.f32 %v2109, %v2149
    %v2151 = vpop.f32.mrf.mxu0
    %v2152 = vpop.f32.mrf.mxu0
    %2153 = vdwg.mxu0
    %2154 = vmatprep.subr.bf16.mxu0 0
    %2155 = vmatpush1.bf16.msra.mxu0 0
    %2156 = vmatprep.subr.bf16.mxu0 0
    %2157 = vmatpush1.bf16.msra.mxu0 0
    %2158 = vmatprep.subr.bf16.mxu0 0
    %2159 = vmatpush1.bf16.msra.mxu0 0
    %2160 = vmatprep.subr.bf16.mxu0 0
    %2161 = vmatpush1.bf16.msra.mxu0 0
    %2162 = vmatprep.subr.bf16.mxu0 0
    %2163 = vmatpush1.bf16.msra.mxu0 0
    %2164 = vmatprep.subr.bf16.mxu0 0
    %2165 = vmatpush1.bf16.msra.mxu0 0
    %2166 = vmatprep.subr.bf16.mxu0 %v1773
    %2167 = vmatpush1.bf16.msra.mxu0 %v1772
    %2168 = vmatprep.subr.bf16.mxu0 %v1768
    %2169 = vmatpush1.bf16.msra.mxu0 %v1767
    %2170 = vmatprep.subr.bf16.mxu0 0
    %2171 = vmatpush2.bf16.msra.mxu0 0
    %2172 = vmatprep.subr.bf16.mxu0 0
    %2173 = vmatpush2.bf16.msra.mxu0 0
    %2174 = vmatprep.subr.bf16.mxu0 0
    %2175 = vmatpush2.bf16.msra.mxu0 0
    %2176 = vmatprep.subr.bf16.mxu0 0
    %2177 = vmatpush2.bf16.msra.mxu0 0
    %2178 = vmatprep.subr.bf16.mxu0 0
    %2179 = vmatpush2.bf16.msra.mxu0 0
    %2180 = vmatprep.subr.bf16.mxu0 0
    %2181 = vmatpush2.bf16.msra.mxu0 0
    %2182 = vmatprep.subr.bf16.mxu0 0
    %2183 = vmatpush2.bf16.msra.mxu0 0
    %2184 = vmatprep.subr.bf16.mxu0 0
    %2185 = vmatpush2.bf16.msra.mxu0 0
    %2186 = vmatprep.mubr.bf16.mxu0 0
    %2187 = vmatmul.mubr.bf16.gmra.mxu0 %v2029
    %v2188 = vpop.f32.mrf.mxu0
    %v2189 = vadd.f32 %v2148, %v2188
    %v2190 = vpop.f32.mrf.mxu0
    %v2191 = vadd.f32 %v2150, %v2190
    %v2192 = vpop.f32.mrf.mxu0
    %v2193 = vpop.f32.mrf.mxu0
    %2194 = vdwg.mxu0
    %2195 = vmatprep.subr.bf16.mxu0 %v1565
    %2196 = vmatpush1.bf16.msra.mxu0 %v1564
    %2197 = vmatprep.subr.bf16.mxu0 %v1560
    %2198 = vmatpush1.bf16.msra.mxu0 %v1559
    %2199 = vmatprep.subr.bf16.mxu0 %v1555
    %2200 = vmatpush1.bf16.msra.mxu0 %v1554
    %2201 = vmatprep.subr.bf16.mxu0 %v1550
    %2202 = vmatpush1.bf16.msra.mxu0 %v1549
    %2203 = vmatprep.subr.bf16.mxu0 %v1545
    %2204 = vmatpush1.bf16.msra.mxu0 %v1544
    %2205 = vmatprep.subr.bf16.mxu0 %v1540
    %2206 = vmatpush1.bf16.msra.mxu0 %v1539
    %2207 = vmatprep.subr.bf16.mxu0 %v1535
    %2208 = vmatpush1.bf16.msra.mxu0 %v1534
    %2209 = vmatprep.subr.bf16.mxu0 %v1530
    %2210 = vmatpush1.bf16.msra.mxu0 %v1529
    %2211 = vmatprep.subr.bf16.mxu0 %v1605
    %2212 = vmatpush2.bf16.msra.mxu0 %v1604
    %2213 = vmatprep.subr.bf16.mxu0 %v1600
    %2214 = vmatpush2.bf16.msra.mxu0 %v1599
    %2215 = vmatprep.subr.bf16.mxu0 %v1595
    %2216 = vmatpush2.bf16.msra.mxu0 %v1594
    %2217 = vmatprep.subr.bf16.mxu0 %v1590
    %2218 = vmatpush2.bf16.msra.mxu0 %v1589
    %2219 = vmatprep.subr.bf16.mxu0 %v1585
    %2220 = vmatpush2.bf16.msra.mxu0 %v1584
    %2221 = vmatprep.subr.bf16.mxu0 %v1580
    %2222 = vmatpush2.bf16.msra.mxu0 %v1579
    %2223 = vmatprep.subr.bf16.mxu0 %v1575
    %2224 = vmatpush2.bf16.msra.mxu0 %v1574
    %2225 = vmatprep.subr.bf16.mxu0 %v1570
    %2226 = vmatpush2.bf16.msra.mxu0 %v1569
    %2227 = vmatprep.mubr.bf16.mxu0 %v394
    %2228 = vmatmul.mubr.bf16.gmra.mxu0 %v393
    %v2229 = vpop.f32.mrf.mxu0
    %v2230 = vadd.f32 %v713, %v2229
    %v2231 = vpop.f32.mrf.mxu0
    %v2232 = vadd.f32 %v717, %v2231
    %v2233 = vpop.f32.mrf.mxu0
    %v2234 = vpop.f32.mrf.mxu0
    %2235 = vdwg.mxu0
    %2236 = vmatprep.subr.bf16.mxu0 %v1645
    %2237 = vmatpush1.bf16.msra.mxu0 %v1644
    %2238 = vmatprep.subr.bf16.mxu0 %v1640
    %2239 = vmatpush1.bf16.msra.mxu0 %v1639
    %2240 = vmatprep.subr.bf16.mxu0 %v1635
    %2241 = vmatpush1.bf16.msra.mxu0 %v1634
    %2242 = vmatprep.subr.bf16.mxu0 %v1630
    %2243 = vmatpush1.bf16.msra.mxu0 %v1629
    %2244 = vmatprep.subr.bf16.mxu0 %v1625
    %2245 = vmatpush1.bf16.msra.mxu0 %v1624
    %2246 = vmatprep.subr.bf16.mxu0 %v1620
    %2247 = vmatpush1.bf16.msra.mxu0 %v1619
    %2248 = vmatprep.subr.bf16.mxu0 %v1615
    %2249 = vmatpush1.bf16.msra.mxu0 %v1614
    %2250 = vmatprep.subr.bf16.mxu0 %v1610
    %2251 = vmatpush1.bf16.msra.mxu0 %v1609
    %2252 = vmatprep.subr.bf16.mxu0 %v1685
    %2253 = vmatpush2.bf16.msra.mxu0 %v1684
    %2254 = vmatprep.subr.bf16.mxu0 %v1680
    %2255 = vmatpush2.bf16.msra.mxu0 %v1679
    %2256 = vmatprep.subr.bf16.mxu0 %v1675
    %2257 = vmatpush2.bf16.msra.mxu0 %v1674
    %2258 = vmatprep.subr.bf16.mxu0 %v1670
    %2259 = vmatpush2.bf16.msra.mxu0 %v1669
    %2260 = vmatprep.subr.bf16.mxu0 %v1665
    %2261 = vmatpush2.bf16.msra.mxu0 %v1664
    %2262 = vmatprep.subr.bf16.mxu0 %v1660
    %2263 = vmatpush2.bf16.msra.mxu0 %v1659
    %2264 = vmatprep.subr.bf16.mxu0 %v1655
    %2265 = vmatpush2.bf16.msra.mxu0 %v1654
    %2266 = vmatprep.subr.bf16.mxu0 %v1650
    %2267 = vmatpush2.bf16.msra.mxu0 %v1649
    %2268 = vmatprep.mubr.bf16.mxu0 %v396
    %2269 = vmatmul.mubr.bf16.gmra.mxu0 %v395
    %v2270 = vpop.f32.mrf.mxu0
    %v2271 = vadd.f32 %v2230, %v2270
    %v2272 = vpop.f32.mrf.mxu0
    %v2273 = vadd.f32 %v2232, %v2272
    %v2274 = vpop.f32.mrf.mxu0
    %v2275 = vpop.f32.mrf.mxu0
    %2276 = vdwg.mxu0
    %2277 = vmatprep.subr.bf16.mxu0 %v1725
    %2278 = vmatpush1.bf16.msra.mxu0 %v1724
    %2279 = vmatprep.subr.bf16.mxu0 %v1720
    %2280 = vmatpush1.bf16.msra.mxu0 %v1719
    %2281 = vmatprep.subr.bf16.mxu0 %v1715
    %2282 = vmatpush1.bf16.msra.mxu0 %v1714
    %2283 = vmatprep.subr.bf16.mxu0 %v1710
    %2284 = vmatpush1.bf16.msra.mxu0 %v1709
    %2285 = vmatprep.subr.bf16.mxu0 %v1705
    %2286 = vmatpush1.bf16.msra.mxu0 %v1704
    %2287 = vmatprep.subr.bf16.mxu0 %v1700
    %2288 = vmatpush1.bf16.msra.mxu0 %v1699
    %2289 = vmatprep.subr.bf16.mxu0 %v1695
    %2290 = vmatpush1.bf16.msra.mxu0 %v1694
    %2291 = vmatprep.subr.bf16.mxu0 %v1690
    %2292 = vmatpush1.bf16.msra.mxu0 %v1689
    %2293 = vmatprep.subr.bf16.mxu0 %v1765
    %2294 = vmatpush2.bf16.msra.mxu0 %v1764
    %2295 = vmatprep.subr.bf16.mxu0 %v1760
    %2296 = vmatpush2.bf16.msra.mxu0 %v1759
    %2297 = vmatprep.subr.bf16.mxu0 %v1755
    %2298 = vmatpush2.bf16.msra.mxu0 %v1754
    %2299 = vmatprep.subr.bf16.mxu0 %v1750
    %2300 = vmatpush2.bf16.msra.mxu0 %v1749
    %2301 = vmatprep.subr.bf16.mxu0 %v1745
    %2302 = vmatpush2.bf16.msra.mxu0 %v1744
    %2303 = vmatprep.subr.bf16.mxu0 %v1740
    %2304 = vmatpush2.bf16.msra.mxu0 %v1739
    %2305 = vmatprep.subr.bf16.mxu0 %v1735
    %2306 = vmatpush2.bf16.msra.mxu0 %v1734
    %2307 = vmatprep.subr.bf16.mxu0 %v1730
    %2308 = vmatpush2.bf16.msra.mxu0 %v1729
    %2309 = vmatprep.mubr.bf16.mxu0 %v398
    %2310 = vmatmul.mubr.bf16.gmra.mxu0 %v397
    %v2311 = vpop.f32.mrf.mxu0
    %v2312 = vadd.f32 %v2271, %v2311
    %v2313 = vpop.f32.mrf.mxu0
    %v2314 = vadd.f32 %v2273, %v2313
    %v2315 = vpop.f32.mrf.mxu0
    %v2316 = vpop.f32.mrf.mxu0
    %2317 = vdwg.mxu0
    %2318 = vmatprep.subr.bf16.mxu0 0
    %2319 = vmatpush1.bf16.msra.mxu0 0
    %2320 = vmatprep.subr.bf16.mxu0 0
    %2321 = vmatpush1.bf16.msra.mxu0 0
    %2322 = vmatprep.subr.bf16.mxu0 0
    %2323 = vmatpush1.bf16.msra.mxu0 0
    %2324 = vmatprep.subr.bf16.mxu0 0
    %2325 = vmatpush1.bf16.msra.mxu0 0
    %2326 = vmatprep.subr.bf16.mxu0 0
    %2327 = vmatpush1.bf16.msra.mxu0 0
    %2328 = vmatprep.subr.bf16.mxu0 0
    %2329 = vmatpush1.bf16.msra.mxu0 0
    %2330 = vmatprep.subr.bf16.mxu0 %v1775
    %2331 = vmatpush1.bf16.msra.mxu0 %v1774
    %2332 = vmatprep.subr.bf16.mxu0 %v1770
    %2333 = vmatpush1.bf16.msra.mxu0 %v1769
    %2334 = vmatprep.subr.bf16.mxu0 0
    %2335 = vmatpush2.bf16.msra.mxu0 0
    %2336 = vmatprep.subr.bf16.mxu0 0
    %2337 = vmatpush2.bf16.msra.mxu0 0
    %2338 = vmatprep.subr.bf16.mxu0 0
    %2339 = vmatpush2.bf16.msra.mxu0 0
    %2340 = vmatprep.subr.bf16.mxu0 0
    %2341 = vmatpush2.bf16.msra.mxu0 0
    %2342 = vmatprep.subr.bf16.mxu0 0
    %2343 = vmatpush2.bf16.msra.mxu0 0
    %2344 = vmatprep.subr.bf16.mxu0 0
    %2345 = vmatpush2.bf16.msra.mxu0 0
    %2346 = vmatprep.subr.bf16.mxu0 0
    %2347 = vmatpush2.bf16.msra.mxu0 0
    %2348 = vmatprep.subr.bf16.mxu0 0
    %2349 = vmatpush2.bf16.msra.mxu0 0
    %2350 = vmatprep.mubr.bf16.mxu0 0
    %2351 = vmatmul.mubr.bf16.gmra.mxu0 %v2029
    %v2352 = vpop.f32.mrf.mxu0
    %v2353 = vadd.f32 %v2312, %v2352
    %v2354 = vpop.f32.mrf.mxu0
    %v2355 = vadd.f32 %v2314, %v2354
    %v2356 = vpop.f32.mrf.mxu0
    %v2357 = vpop.f32.mrf.mxu0
    %2358 = vdwg.mxu0
    %2359 = vmatprep.subr.bf16.mxu0 0
    %2360 = vmatpush1.bf16.msra.mxu0 %v1566
    %2361 = vmatprep.subr.bf16.mxu0 0
    %2362 = vmatpush1.bf16.msra.mxu0 %v1561
    %2363 = vmatprep.subr.bf16.mxu0 0
    %2364 = vmatpush1.bf16.msra.mxu0 %v1556
    %2365 = vmatprep.subr.bf16.mxu0 0
    %2366 = vmatpush1.bf16.msra.mxu0 %v1551
    %2367 = vmatprep.subr.bf16.mxu0 0
    %2368 = vmatpush1.bf16.msra.mxu0 %v1546
    %2369 = vmatprep.subr.bf16.mxu0 0
    %2370 = vmatpush1.bf16.msra.mxu0 %v1541
    %2371 = vmatprep.subr.bf16.mxu0 0
    %2372 = vmatpush1.bf16.msra.mxu0 %v1536
    %2373 = vmatprep.subr.bf16.mxu0 0
    %2374 = vmatpush1.bf16.msra.mxu0 %v1531
    %2375 = vmatprep.subr.bf16.mxu0 0
    %2376 = vmatpush2.bf16.msra.mxu0 %v1606
    %2377 = vmatprep.subr.bf16.mxu0 0
    %2378 = vmatpush2.bf16.msra.mxu0 %v1601
    %2379 = vmatprep.subr.bf16.mxu0 0
    %2380 = vmatpush2.bf16.msra.mxu0 %v1596
    %2381 = vmatprep.subr.bf16.mxu0 0
    %2382 = vmatpush2.bf16.msra.mxu0 %v1591
    %2383 = vmatprep.subr.bf16.mxu0 0
    %2384 = vmatpush2.bf16.msra.mxu0 %v1586
    %2385 = vmatprep.subr.bf16.mxu0 0
    %2386 = vmatpush2.bf16.msra.mxu0 %v1581
    %2387 = vmatprep.subr.bf16.mxu0 0
    %2388 = vmatpush2.bf16.msra.mxu0 %v1576
    %2389 = vmatprep.subr.bf16.mxu0 0
    %2390 = vmatpush2.bf16.msra.mxu0 %v1571
    %2391 = vmatprep.mubr.bf16.mxu0 %v394
    %2392 = vmatmul.mubr.bf16.gmra.mxu0 %v393
    %v2393 = vpop.f32.mrf.mxu0
    %v2394 = vadd.f32 %v721, %v2393
    %v2395 = vpop.f32.mrf.mxu0
    %v2396 = vpop.f32.mrf.mxu0
    %v2397 = vpop.f32.mrf.mxu0
    %2398 = vdwg.mxu0
    %2399 = vmatprep.subr.bf16.mxu0 0
    %2400 = vmatpush1.bf16.msra.mxu0 %v1646
    %2401 = vmatprep.subr.bf16.mxu0 0
    %2402 = vmatpush1.bf16.msra.mxu0 %v1641
    %2403 = vmatprep.subr.bf16.mxu0 0
    %2404 = vmatpush1.bf16.msra.mxu0 %v1636
    %2405 = vmatprep.subr.bf16.mxu0 0
    %2406 = vmatpush1.bf16.msra.mxu0 %v1631
    %2407 = vmatprep.subr.bf16.mxu0 0
    %2408 = vmatpush1.bf16.msra.mxu0 %v1626
    %2409 = vmatprep.subr.bf16.mxu0 0
    %2410 = vmatpush1.bf16.msra.mxu0 %v1621
    %2411 = vmatprep.subr.bf16.mxu0 0
    %2412 = vmatpush1.bf16.msra.mxu0 %v1616
    %2413 = vmatprep.subr.bf16.mxu0 0
    %2414 = vmatpush1.bf16.msra.mxu0 %v1611
    %2415 = vmatprep.subr.bf16.mxu0 0
    %2416 = vmatpush2.bf16.msra.mxu0 %v1686
    %2417 = vmatprep.subr.bf16.mxu0 0
    %2418 = vmatpush2.bf16.msra.mxu0 %v1681
    %2419 = vmatprep.subr.bf16.mxu0 0
    %2420 = vmatpush2.bf16.msra.mxu0 %v1676
    %2421 = vmatprep.subr.bf16.mxu0 0
    %2422 = vmatpush2.bf16.msra.mxu0 %v1671
    %2423 = vmatprep.subr.bf16.mxu0 0
    %2424 = vmatpush2.bf16.msra.mxu0 %v1666
    %2425 = vmatprep.subr.bf16.mxu0 0
    %2426 = vmatpush2.bf16.msra.mxu0 %v1661
    %2427 = vmatprep.subr.bf16.mxu0 0
    %2428 = vmatpush2.bf16.msra.mxu0 %v1656
    %2429 = vmatprep.subr.bf16.mxu0 0
    %2430 = vmatpush2.bf16.msra.mxu0 %v1651
    %2431 = vmatprep.mubr.bf16.mxu0 %v396
    %2432 = vmatmul.mubr.bf16.gmra.mxu0 %v395
    %v2433 = vpop.f32.mrf.mxu0
    %v2434 = vadd.f32 %v2394, %v2433
    %v2435 = vpop.f32.mrf.mxu0
    %v2436 = vpop.f32.mrf.mxu0
    %v2437 = vpop.f32.mrf.mxu0
    %2438 = vdwg.mxu0
    %2439 = vmatprep.subr.bf16.mxu0 0
    %2440 = vmatpush1.bf16.msra.mxu0 %v1726
    %2441 = vmatprep.subr.bf16.mxu0 0
    %2442 = vmatpush1.bf16.msra.mxu0 %v1721
    %2443 = vmatprep.subr.bf16.mxu0 0
    %2444 = vmatpush1.bf16.msra.mxu0 %v1716
    %2445 = vmatprep.subr.bf16.mxu0 0
    %2446 = vmatpush1.bf16.msra.mxu0 %v1711
    %2447 = vmatprep.subr.bf16.mxu0 0
    %2448 = vmatpush1.bf16.msra.mxu0 %v1706
    %2449 = vmatprep.subr.bf16.mxu0 0
    %2450 = vmatpush1.bf16.msra.mxu0 %v1701
    %2451 = vmatprep.subr.bf16.mxu0 0
    %2452 = vmatpush1.bf16.msra.mxu0 %v1696
    %2453 = vmatprep.subr.bf16.mxu0 0
    %2454 = vmatpush1.bf16.msra.mxu0 %v1691
    %2455 = vmatprep.subr.bf16.mxu0 0
    %2456 = vmatpush2.bf16.msra.mxu0 %v1766
    %2457 = vmatprep.subr.bf16.mxu0 0
    %2458 = vmatpush2.bf16.msra.mxu0 %v1761
    %2459 = vmatprep.subr.bf16.mxu0 0
    %2460 = vmatpush2.bf16.msra.mxu0 %v1756
    %2461 = vmatprep.subr.bf16.mxu0 0
    %2462 = vmatpush2.bf16.msra.mxu0 %v1751
    %2463 = vmatprep.subr.bf16.mxu0 0
    %2464 = vmatpush2.bf16.msra.mxu0 %v1746
    %2465 = vmatprep.subr.bf16.mxu0 0
    %2466 = vmatpush2.bf16.msra.mxu0 %v1741
    %2467 = vmatprep.subr.bf16.mxu0 0
    %2468 = vmatpush2.bf16.msra.mxu0 %v1736
    %2469 = vmatprep.subr.bf16.mxu0 0
    %2470 = vmatpush2.bf16.msra.mxu0 %v1731
    %2471 = vmatprep.mubr.bf16.mxu0 %v398
    %2472 = vmatmul.mubr.bf16.gmra.mxu0 %v397
    %v2473 = vpop.f32.mrf.mxu0
    %v2474 = vadd.f32 %v2434, %v2473
    %v2475 = vpop.f32.mrf.mxu0
    %v2476 = vpop.f32.mrf.mxu0
    %v2477 = vpop.f32.mrf.mxu0
    %2478 = vdwg.mxu0
    %2479 = vmatprep.subr.bf16.mxu0 0
    %2480 = vmatpush1.bf16.msra.mxu0 0
    %2481 = vmatprep.subr.bf16.mxu0 0
    %2482 = vmatpush1.bf16.msra.mxu0 0
    %2483 = vmatprep.subr.bf16.mxu0 0
    %2484 = vmatpush1.bf16.msra.mxu0 0
    %2485 = vmatprep.subr.bf16.mxu0 0
    %2486 = vmatpush1.bf16.msra.mxu0 0
    %2487 = vmatprep.subr.bf16.mxu0 0
    %2488 = vmatpush1.bf16.msra.mxu0 0
    %2489 = vmatprep.subr.bf16.mxu0 0
    %2490 = vmatpush1.bf16.msra.mxu0 0
    %2491 = vmatprep.subr.bf16.mxu0 0
    %2492 = vmatpush1.bf16.msra.mxu0 %v1776
    %2493 = vmatprep.subr.bf16.mxu0 0
    %2494 = vmatpush1.bf16.msra.mxu0 %v1771
    %2495 = vmatprep.subr.bf16.mxu0 0
    %2496 = vmatpush2.bf16.msra.mxu0 0
    %2497 = vmatprep.subr.bf16.mxu0 0
    %2498 = vmatpush2.bf16.msra.mxu0 0
    %2499 = vmatprep.subr.bf16.mxu0 0
    %2500 = vmatpush2.bf16.msra.mxu0 0
    %2501 = vmatprep.subr.bf16.mxu0 0
    %2502 = vmatpush2.bf16.msra.mxu0 0
    %2503 = vmatprep.subr.bf16.mxu0 0
    %2504 = vmatpush2.bf16.msra.mxu0 0
    %2505 = vmatprep.subr.bf16.mxu0 0
    %2506 = vmatpush2.bf16.msra.mxu0 0
    %2507 = vmatprep.subr.bf16.mxu0 0
    %2508 = vmatpush2.bf16.msra.mxu0 0
    %2509 = vmatprep.subr.bf16.mxu0 0
    %2510 = vmatpush2.bf16.msra.mxu0 0
    %2511 = vmatprep.mubr.bf16.mxu0 0
    %2512 = vmatmul.mubr.bf16.gmra.mxu0 %v2029
    %v2513 = vpop.f32.mrf.mxu0
    %v2514 = vadd.f32 %v2474, %v2513
    %v2515 = vpop.f32.mrf.mxu0
    %v2516 = vpop.f32.mrf.mxu0
    %v2517 = vpop.f32.mrf.mxu0
    %2518 = vdwg.mxu0
    %v2519 = vmax.f32 %v2189, 0.0
    %v2520 = vmax.f32 %v2191, 0.0
    %v2521 = vmax.f32 %v2353, 0.0
    %v2522 = vmax.f32 %v2355, 0.0
    %v2523 = vmax.f32 %v2514, 0.0
    %v2524 = vpack.c.bf16 %v2519, %v2519
    %v2525 = vpack.c.bf16 %v2520, %v2520
    %v2526 = vpack.c.bf16 %v2521, %v2521
    %v2527 = vpack.c.bf16 %v2522, %v2522
    %v2528 = vpack.c.bf16 %v2523, %v2523
    %v2529 = vld [vmem:[#allocation10] sm:$0xf]
    %v2530 = vld [vmem:[#allocation10 + $0x4] sm:$0xf]
    %v2531 = vld [vmem:[#allocation10 + $0x8] sm:$0xf]
    %v2532 = vld [vmem:[#allocation10 + $0xc] sm:$0xf]
    %v2533 = vld [vmem:[#allocation10 + $0x10] sm:$0xf]
    %v2534 = vld [vmem:[#allocation10 + $0x14] sm:$0xf]
    %v2535 = vld [vmem:[#allocation10 + $0x18] sm:$0xf]
    %v2536 = vld [vmem:[#allocation10 + $0x1c] sm:$0xf]
    %v2537 = vld [vmem:[#allocation10 + $0x20] sm:$0xf]
    %v2538 = vld [vmem:[#allocation10 + $0x24] sm:$0xf]
    %v2539 = vld [vmem:[#allocation10 + $0x28] sm:$0xf]
    %v2540 = vld [vmem:[#allocation10 + $0x2c] sm:$0xf]
    %v2541 = vld [vmem:[#allocation10 + $0x30] sm:$0xf]
    %v2542 = vld [vmem:[#allocation10 + $0x34] sm:$0xf]
    %v2543 = vld [vmem:[#allocation10 + $0x38] sm:$0xf]
    %v2544 = vld [vmem:[#allocation10 + $0x3c] sm:$0xf]
    %v2545 = vld [vmem:[#allocation10 + $0x40] sm:$0xf]
    %v2546 = vld [vmem:[#allocation10 + $0x44] sm:$0xf]
    %v2547 = vld [vmem:[#allocation10 + $0x48] sm:$0xf]
    %v2548 = vld [vmem:[#allocation10 + $0x4c] sm:$0xf]
    %v2549 = vld [vmem:[#allocation10 + $0x50] sm:$0xf]
    %v2550 = vld [vmem:[#allocation10 + $0x54] sm:$0xf]
    %v2551 = vld [vmem:[#allocation10 + $0x58] sm:$0xf]
    %v2552 = vld [vmem:[#allocation10 + $0x5c] sm:$0xf]
    %v2553 = vld [vmem:[#allocation10 + $0x60] sm:$0xf]
    %v2554 = vld [vmem:[#allocation10 + $0x64] sm:$0xf]
    %v2555 = vld [vmem:[#allocation10 + $0x68] sm:$0xf]
    %v2556 = vld [vmem:[#allocation10 + $0x6c] sm:$0xf]
    %v2557 = vld [vmem:[#allocation10 + $0x70] sm:$0xf]
    %v2558 = vld [vmem:[#allocation10 + $0x74] sm:$0xf]
    %v2559 = vld [vmem:[#allocation10 + $0x78] sm:$0xf]
    %v2560 = vld [vmem:[#allocation10 + $0x7c] sm:$0xf]
    %v2561 = vld [vmem:[#allocation10 + $0x80] sm:$0xf]
    %v2562 = vld [vmem:[#allocation10 + $0x84] sm:$0xf]
    %v2563 = vld [vmem:[#allocation10 + $0x88] sm:$0xf]
    %v2564 = vld [vmem:[#allocation10 + $0x8c] sm:$0xf]
    %v2565 = vld [vmem:[#allocation10 + $0x90] sm:$0xf]
    %v2566 = vld [vmem:[#allocation10 + $0x94] sm:$0xf]
    %v2567 = vld [vmem:[#allocation10 + $0x98] sm:$0xf]
    %v2568 = vld [vmem:[#allocation10 + $0x9c] sm:$0xf]
    %v2569 = vld [vmem:[#allocation10 + $0xa0] sm:$0xf]
    %v2570 = vld [vmem:[#allocation10 + $0xa4] sm:$0xf]
    %v2571 = vld [vmem:[#allocation10 + $0xa8] sm:$0xf]
    %v2572 = vld [vmem:[#allocation10 + $0xac] sm:$0xf]
    %v2573 = vld [vmem:[#allocation10 + $0xb0] sm:$0xf]
    %v2574 = vld [vmem:[#allocation10 + $0xb4] sm:$0xf]
    %v2575 = vld [vmem:[#allocation10 + $0xb8] sm:$0xf]
    %v2576 = vld [vmem:[#allocation10 + $0xbc] sm:$0xf]
    %v2577 = vld [vmem:[#allocation10 + $0xc0] sm:$0xf]
    %v2578 = vld [vmem:[#allocation10 + $0xc4] sm:$0xf]
    %v2579 = vld [vmem:[#allocation10 + $0xc8] sm:$0xf]
    %v2580 = vld [vmem:[#allocation10 + $0xcc] sm:$0xf]
    %v2581 = vld [vmem:[#allocation10 + $0xd0] sm:$0xf]
    %v2582 = vld [vmem:[#allocation10 + $0xd4] sm:$0xf]
    %v2583 = vld [vmem:[#allocation10 + $0xd8] sm:$0xf]
    %v2584 = vld [vmem:[#allocation10 + $0xdc] sm:$0xf]
    %v2585 = vld [vmem:[#allocation10 + $0xe0] sm:$0xf]
    %v2586 = vld [vmem:[#allocation10 + $0xe4] sm:$0xf]
    %v2587 = vld [vmem:[#allocation10 + $0xe8] sm:$0xf]
    %v2588 = vld [vmem:[#allocation10 + $0xec] sm:$0xf]
    %v2589 = vld [vmem:[#allocation10 + $0xf0] sm:$0xf]
    %v2590 = vld [vmem:[#allocation10 + $0xf4] sm:$0xf]
    %v2591 = vld [vmem:[#allocation10 + $0xf8] sm:$0xf]
    %v2592 = vld [vmem:[#allocation10 + $0xfc] sm:$0xf]
    %v2593 = vld [vmem:[#allocation10 + $0x100] sm:$0xf]
    %v2594 = vld [vmem:[#allocation10 + $0x104] sm:$0xf]
    %v2595 = vld [vmem:[#allocation10 + $0x108] sm:$0xf]
    %v2596 = vld [vmem:[#allocation10 + $0x10c] sm:$0xf]
    %v2597 = vld [vmem:[#allocation10 + $0x110] sm:$0xf]
    %v2598 = vld [vmem:[#allocation10 + $0x114] sm:$0xf]
    %v2599 = vld [vmem:[#allocation10 + $0x118] sm:$0xf]
    %v2600 = vld [vmem:[#allocation10 + $0x11c] sm:$0xf]
    %v2601 = vld [vmem:[#allocation10 + $0x120] sm:$0xf]
    %v2602 = vld [vmem:[#allocation10 + $0x124] sm:$0xf]
    %v2603 = vld [vmem:[#allocation10 + $0x128] sm:$0xf]
    %v2604 = vld [vmem:[%s6] sm:$0x1]
    %v2606 = vlaneseq
    %v2607 = vshrl.u32 %v2606, 7
    %v2608 = vsub.s32 0, %v2607
    %v2609 = vrot.slane %v2604, %v2608
    %v2686 = vunpack.c.l.b16 %v2529
    %v2687 = vunpack.c.l.b16 %v2530
    %v2688 = vunpack.c.l.b16 %v2531
    %v2689 = vunpack.c.l.b16 %v2532
    %v2690 = vunpack.c.l.b16 %v2533
    %v2691 = vunpack.c.l.b16 %v2534
    %v2692 = vunpack.c.l.b16 %v2535
    %v2693 = vunpack.c.l.b16 %v2536
    %v2694 = vunpack.c.l.b16 %v2537
    %v2695 = vunpack.c.l.b16 %v2538
    %v2696 = vunpack.c.l.b16 %v2539
    %v2697 = vunpack.c.l.b16 %v2540
    %v2698 = vunpack.c.l.b16 %v2541
    %v2699 = vunpack.c.l.b16 %v2542
    %v2700 = vunpack.c.l.b16 %v2543
    %v2701 = vunpack.c.l.b16 %v2544
    %v2702 = vunpack.c.l.b16 %v2545
    %v2703 = vunpack.c.l.b16 %v2546
    %v2704 = vunpack.c.l.b16 %v2547
    %v2705 = vunpack.c.l.b16 %v2548
    %v2706 = vunpack.c.l.b16 %v2549
    %v2707 = vunpack.c.l.b16 %v2550
    %v2708 = vunpack.c.l.b16 %v2551
    %v2709 = vunpack.c.l.b16 %v2552
    %v2710 = vunpack.c.l.b16 %v2553
    %v2711 = vunpack.c.l.b16 %v2554
    %v2712 = vunpack.c.l.b16 %v2555
    %v2713 = vunpack.c.l.b16 %v2556
    %v2714 = vunpack.c.l.b16 %v2557
    %v2715 = vunpack.c.l.b16 %v2558
    %v2716 = vunpack.c.l.b16 %v2559
    %v2717 = vunpack.c.l.b16 %v2560
    %v2718 = vunpack.c.l.b16 %v2561
    %v2719 = vunpack.c.l.b16 %v2562
    %v2720 = vunpack.c.l.b16 %v2563
    %v2721 = vunpack.c.l.b16 %v2564
    %v2722 = vunpack.c.l.b16 %v2565
    %v2723 = vunpack.c.l.b16 %v2566
    %v2724 = vunpack.c.l.b16 %v2567
    %v2725 = vunpack.c.l.b16 %v2568
    %v2726 = vunpack.c.l.b16 %v2569
    %v2727 = vunpack.c.l.b16 %v2570
    %v2728 = vunpack.c.l.b16 %v2571
    %v2729 = vunpack.c.l.b16 %v2572
    %v2730 = vunpack.c.l.b16 %v2573
    %v2731 = vunpack.c.l.b16 %v2574
    %v2732 = vunpack.c.l.b16 %v2575
    %v2733 = vunpack.c.l.b16 %v2576
    %v2734 = vunpack.c.l.b16 %v2577
    %v2735 = vunpack.c.l.b16 %v2578
    %v2736 = vunpack.c.l.b16 %v2579
    %v2737 = vunpack.c.l.b16 %v2580
    %v2738 = vunpack.c.l.b16 %v2581
    %v2739 = vunpack.c.l.b16 %v2582
    %v2740 = vunpack.c.l.b16 %v2583
    %v2741 = vunpack.c.l.b16 %v2584
    %v2742 = vunpack.c.l.b16 %v2585
    %v2743 = vunpack.c.l.b16 %v2586
    %v2744 = vunpack.c.l.b16 %v2587
    %v2745 = vunpack.c.l.b16 %v2588
    %v2746 = vunpack.c.l.b16 %v2589
    %v2747 = vunpack.c.l.b16 %v2590
    %v2748 = vunpack.c.l.b16 %v2591
    %v2749 = vunpack.c.l.b16 %v2592
    %v2750 = vunpack.c.l.b16 %v2593
    %v2751 = vunpack.c.l.b16 %v2594
    %v2752 = vunpack.c.l.b16 %v2595
    %v2753 = vunpack.c.l.b16 %v2596
    %v2754 = vunpack.c.l.b16 %v2597
    %v2755 = vunpack.c.l.b16 %v2598
    %v2756 = vunpack.c.l.b16 %v2599
    %v2757 = vunpack.c.l.b16 %v2600
    %v2758 = vunpack.c.l.b16 %v2601
    %v2759 = vunpack.c.l.b16 %v2602
    %v2760 = vunpack.c.l.b16 %v2603
    %v2761 = vpack.c.b16 %v2687, %v2686
    %v2762 = vpack.c.b16 %v2689, %v2688
    %v2763 = vpack.c.b16 %v2691, %v2690
    %v2764 = vpack.c.b16 %v2693, %v2692
    %v2765 = vpack.c.b16 %v2695, %v2694
    %v2766 = vpack.c.b16 %v2697, %v2696
    %v2767 = vpack.c.b16 %v2699, %v2698
    %v2768 = vpack.c.b16 %v2701, %v2700
    %v2769 = vpack.c.b16 %v2703, %v2702
    %v2770 = vpack.c.b16 %v2705, %v2704
    %v2771 = vpack.c.b16 %v2707, %v2706
    %v2772 = vpack.c.b16 %v2709, %v2708
    %v2773 = vpack.c.b16 %v2711, %v2710
    %v2774 = vpack.c.b16 %v2713, %v2712
    %v2775 = vpack.c.b16 %v2715, %v2714
    %v2776 = vpack.c.b16 %v2717, %v2716
    %v2777 = vpack.c.b16 %v2719, %v2718
    %v2778 = vpack.c.b16 %v2721, %v2720
    %v2779 = vpack.c.b16 %v2723, %v2722
    %v2780 = vpack.c.b16 %v2725, %v2724
    %v2781 = vpack.c.b16 %v2727, %v2726
    %v2782 = vpack.c.b16 %v2729, %v2728
    %v2783 = vpack.c.b16 %v2731, %v2730
    %v2784 = vpack.c.b16 %v2733, %v2732
    %v2785 = vpack.c.b16 %v2735, %v2734
    %v2786 = vpack.c.b16 %v2737, %v2736
    %v2787 = vpack.c.b16 %v2739, %v2738
    %v2788 = vpack.c.b16 %v2741, %v2740
    %v2789 = vpack.c.b16 %v2743, %v2742
    %v2790 = vpack.c.b16 %v2745, %v2744
    %v2791 = vpack.c.b16 %v2747, %v2746
    %v2792 = vpack.c.b16 %v2749, %v2748
    %v2793 = vpack.c.b16 %v2751, %v2750
    %v2794 = vpack.c.b16 %v2753, %v2752
    %v2795 = vpack.c.b16 %v2755, %v2754
    %v2796 = vpack.c.b16 %v2757, %v2756
    %v2797 = vpack.c.b16 %v2759, %v2758
    %v2798 = vpack.c.b16 %v2760, %v2760
    %vm2836 = vcmask 719872
    %v2838 = vsel %vm2836, %v2528, 0
    %v2841 = vsel %vm201, %v2798, 0
    %2843 = vmatprep.subr.bf16.mxu0 0
    %2844 = vmatpush1.bf16.msra.mxu0 %v2768
    %2845 = vmatprep.subr.bf16.mxu0 0
    %2846 = vmatpush1.bf16.msra.mxu0 %v2767
    %2847 = vmatprep.subr.bf16.mxu0 0
    %2848 = vmatpush1.bf16.msra.mxu0 %v2766
    %2849 = vmatprep.subr.bf16.mxu0 0
    %2850 = vmatpush1.bf16.msra.mxu0 %v2765
    %2851 = vmatprep.subr.bf16.mxu0 0
    %2852 = vmatpush1.bf16.msra.mxu0 %v2764
    %2853 = vmatprep.subr.bf16.mxu0 0
    %2854 = vmatpush1.bf16.msra.mxu0 %v2763
    %2855 = vmatprep.subr.bf16.mxu0 0
    %2856 = vmatpush1.bf16.msra.mxu0 %v2762
    %2857 = vmatprep.subr.bf16.mxu0 0
    %2858 = vmatpush1.bf16.msra.mxu0 %v2761
    %2859 = vmatprep.subr.bf16.mxu0 0
    %2860 = vmatpush2.bf16.msra.mxu0 %v2776
    %2861 = vmatprep.subr.bf16.mxu0 0
    %2862 = vmatpush2.bf16.msra.mxu0 %v2775
    %2863 = vmatprep.subr.bf16.mxu0 0
    %2864 = vmatpush2.bf16.msra.mxu0 %v2774
    %2865 = vmatprep.subr.bf16.mxu0 0
    %2866 = vmatpush2.bf16.msra.mxu0 %v2773
    %2867 = vmatprep.subr.bf16.mxu0 0
    %2868 = vmatpush2.bf16.msra.mxu0 %v2772
    %2869 = vmatprep.subr.bf16.mxu0 0
    %2870 = vmatpush2.bf16.msra.mxu0 %v2771
    %2871 = vmatprep.subr.bf16.mxu0 0
    %2872 = vmatpush2.bf16.msra.mxu0 %v2770
    %2873 = vmatprep.subr.bf16.mxu0 0
    %2874 = vmatpush2.bf16.msra.mxu0 %v2769
    %2875 = vmatprep.mubr.bf16.mxu0 %v2525
    %2876 = vmatmul.mubr.bf16.gmra.mxu0 %v2524
    %v2877 = vpop.f32.mrf.mxu0
    %v2878 = vadd.f32 %v2609, %v2877
    %v2879 = vpop.f32.mrf.mxu0
    %v2880 = vpop.f32.mrf.mxu0
    %v2881 = vpop.f32.mrf.mxu0
    %2882 = vdwg.mxu0
    %2883 = vmatprep.subr.bf16.mxu0 0
    %2884 = vmatpush1.bf16.msra.mxu0 %v2784
    %2885 = vmatprep.subr.bf16.mxu0 0
    %2886 = vmatpush1.bf16.msra.mxu0 %v2783
    %2887 = vmatprep.subr.bf16.mxu0 0
    %2888 = vmatpush1.bf16.msra.mxu0 %v2782
    %2889 = vmatprep.subr.bf16.mxu0 0
    %2890 = vmatpush1.bf16.msra.mxu0 %v2781
    %2891 = vmatprep.subr.bf16.mxu0 0
    %2892 = vmatpush1.bf16.msra.mxu0 %v2780
    %2893 = vmatprep.subr.bf16.mxu0 0
    %2894 = vmatpush1.bf16.msra.mxu0 %v2779
    %2895 = vmatprep.subr.bf16.mxu0 0
    %2896 = vmatpush1.bf16.msra.mxu0 %v2778
    %2897 = vmatprep.subr.bf16.mxu0 0
    %2898 = vmatpush1.bf16.msra.mxu0 %v2777
    %2899 = vmatprep.subr.bf16.mxu0 0
    %2900 = vmatpush2.bf16.msra.mxu0 %v2792
    %2901 = vmatprep.subr.bf16.mxu0 0
    %2902 = vmatpush2.bf16.msra.mxu0 %v2791
    %2903 = vmatprep.subr.bf16.mxu0 0
    %2904 = vmatpush2.bf16.msra.mxu0 %v2790
    %2905 = vmatprep.subr.bf16.mxu0 0
    %2906 = vmatpush2.bf16.msra.mxu0 %v2789
    %2907 = vmatprep.subr.bf16.mxu0 0
    %2908 = vmatpush2.bf16.msra.mxu0 %v2788
    %2909 = vmatprep.subr.bf16.mxu0 0
    %2910 = vmatpush2.bf16.msra.mxu0 %v2787
    %2911 = vmatprep.subr.bf16.mxu0 0
    %2912 = vmatpush2.bf16.msra.mxu0 %v2786
    %2913 = vmatprep.subr.bf16.mxu0 0
    %2914 = vmatpush2.bf16.msra.mxu0 %v2785
    %2915 = vmatprep.mubr.bf16.mxu0 %v2527
    %2916 = vmatmul.mubr.bf16.gmra.mxu0 %v2526
    %v2917 = vpop.f32.mrf.mxu0
    %v2918 = vadd.f32 %v2878, %v2917
    %v2919 = vpop.f32.mrf.mxu0
    %v2920 = vpop.f32.mrf.mxu0
    %v2921 = vpop.f32.mrf.mxu0
    %2922 = vdwg.mxu0
    %2923 = vmatprep.subr.bf16.mxu0 0
    %2924 = vmatpush1.bf16.msra.mxu0 0
    %2925 = vmatprep.subr.bf16.mxu0 0
    %2926 = vmatpush1.bf16.msra.mxu0 0
    %2927 = vmatprep.subr.bf16.mxu0 0
    %2928 = vmatpush1.bf16.msra.mxu0 %v2841
    %2929 = vmatprep.subr.bf16.mxu0 0
    %2930 = vmatpush1.bf16.msra.mxu0 %v2797
    %2931 = vmatprep.subr.bf16.mxu0 0
    %2932 = vmatpush1.bf16.msra.mxu0 %v2796
    %2933 = vmatprep.subr.bf16.mxu0 0
    %2934 = vmatpush1.bf16.msra.mxu0 %v2795
    %2935 = vmatprep.subr.bf16.mxu0 0
    %2936 = vmatpush1.bf16.msra.mxu0 %v2794
    %2937 = vmatprep.subr.bf16.mxu0 0
    %2938 = vmatpush1.bf16.msra.mxu0 %v2793
    %2939 = vmatprep.subr.bf16.mxu0 0
    %2940 = vmatpush2.bf16.msra.mxu0 0
    %2941 = vmatprep.subr.bf16.mxu0 0
    %2942 = vmatpush2.bf16.msra.mxu0 0
    %2943 = vmatprep.subr.bf16.mxu0 0
    %2944 = vmatpush2.bf16.msra.mxu0 0
    %2945 = vmatprep.subr.bf16.mxu0 0
    %2946 = vmatpush2.bf16.msra.mxu0 0
    %2947 = vmatprep.subr.bf16.mxu0 0
    %2948 = vmatpush2.bf16.msra.mxu0 0
    %2949 = vmatprep.subr.bf16.mxu0 0
    %2950 = vmatpush2.bf16.msra.mxu0 0
    %2951 = vmatprep.subr.bf16.mxu0 0
    %2952 = vmatpush2.bf16.msra.mxu0 0
    %2953 = vmatprep.subr.bf16.mxu0 0
    %2954 = vmatpush2.bf16.msra.mxu0 0
    %2955 = vmatprep.mubr.bf16.mxu0 0
    %2956 = vmatmul.mubr.bf16.gmra.mxu0 %v2838
    %v2957 = vpop.f32.mrf.mxu0
    %v2958 = vadd.f32 %v2918, %v2957
    %v2959 = vpop.f32.mrf.mxu0
    %v2960 = vpop.f32.mrf.mxu0
    %v2961 = vpop.f32.mrf.mxu0
    %2962 = vdwg.mxu0
    %2963 = vst [vmem:[#allocation11] sm:$0xff] %v2958
    // Predicated region
    $region50: #{tpu_custom_call.1} parent=1 // pred_check
      _
    $region51: #{tpu_custom_call.1} parent=1 // pred_check_branch
      %2965 = sbr.rel (0) target = $region53
    $region52: #{tpu_custom_call.1} parent=1 // pred_region
      %s2967 = ssub.s32 128, 128
      %2968 = vsyncadd [#allocation4], %s2967
      %s2970 = sshll.u32 [#allocation11], 4
      %s2971 = int_to_ptr.vmem [resolvable:$true] %s2970
      %2973 = dma.vmem_to_hbm [thread:$0]  %s2971, 128, %s7, [#allocation4]
    $region53: #{tpu_custom_call.1} parent=1 // pred_fallthru
      _
    // Predicated region
    $region54: #{tpu_custom_call.1} parent=1 // pred_check
      _
    $region55: #{tpu_custom_call.1} parent=1 // pred_check_branch
      %2975 = sbr.rel (0) target = $region57
    $region56: #{tpu_custom_call.1} parent=1 // pred_region
      %2976 = dma.done [#allocation4], 128
    $region57: #{tpu_custom_call.1} parent=1 // pred_fallthru
      _
    %2977 = vsyncpa [#allocation3], 1
    %2978 = vsyncpa [#allocation6], 1
    %2979 = vsyncpa [#allocation9], 1
    %2980 = vsyncpa [#allocation4], 1

</llo_original>
